<compile_context>
chip_gen: v7x
topology: tpu7x:2x2x1
jax: 0.10.0
libtpu: 0.0.40
codegen_flags: <defaults>
</compile_context>

<pallas_src>
import functools
import math

import jax
import jax.numpy as jnp
from jax.experimental import pallas as pl
from jax.experimental.pallas import tpu as pltpu


def _mha_kernel(*refs, n_head, d_k, d_v, eps, return_attn, compute_dtype):
    if return_attn:
        (q_ref, k_ref, v_ref, wq_ref, wk_ref, wv_ref, wfc_ref,
         gamma_ref, beta_ref, out_ref, attn_ref, qh_s, kh_s, vh_s) = refs
    else:
        (q_ref, k_ref, v_ref, wq_ref, wk_ref, wv_ref, wfc_ref,
         gamma_ref, beta_ref, out_ref, qh_s, kh_s, vh_s) = refs
        attn_ref = None

    q_in = q_ref[0]                      # (tq, d_model) f32
    k_in = k_ref[0]                      # (lk, d_model) f32
    v_in = v_ref[0]                      # (lv, d_model) f32
    residual = q_in

    q_c = q_in.astype(compute_dtype)
    k_c = k_in.astype(compute_dtype)
    v_c = v_in.astype(compute_dtype)

    scale = 1.0 / math.sqrt(d_k)

    # Per-head projections: each contracts over the full d_model (deep MXU contraction),
    # results land head-major in VMEM scratch (no activation lane-slicing afterwards).
    for h in range(n_head):
        qh = jnp.dot(q_c, wq_ref[h], preferred_element_type=jnp.float32)
        qh_s[h] = (qh * scale).astype(compute_dtype)          # scale applied once, to Q only
        kh_s[h] = jnp.dot(k_c, wk_ref[h],
                          preferred_element_type=jnp.float32).astype(compute_dtype)
        vh_s[h] = jnp.dot(v_c, wv_ref[h],
                          preferred_element_type=jnp.float32).astype(compute_dtype)

    Qh = qh_s[...]                       # (H, tq, d_k) bf16
    Kh = kh_s[...]                       # (H, lk, d_k) bf16
    Vh = vh_s[...]                       # (H, lv, d_v) bf16

    # All-head scores in one batched contraction (contract last dims -> no explicit transpose).
    scores = jnp.einsum('hqd,hkd->hqk', Qh, Kh,
                        preferred_element_type=jnp.float32)   # (H, tq, lk) f32

    # Softmax in f32; divide via EUP approximate reciprocal.
    m = jnp.max(scores, axis=-1, keepdims=True)
    e = jnp.exp(scores - m)
    denom = jnp.sum(e, axis=-1, keepdims=True)
    p = e * pl.reciprocal(denom, approx=True)                 # (H, tq, lk)

    if attn_ref is not None:
        attn_ref[0] = p

    # Attention-weighted values, batched over heads.
    ctx = jnp.einsum('hqk,hkd->hqd', p.astype(compute_dtype), Vh,
                     preferred_element_type=jnp.float32)      # (H, tq, d_v)

    # Output projection: per-head (d_v, d_model) weight tiles, batched matmul + head-sum.
    # Equivalent to concat(heads) @ W_fc but without lane concatenation.
    o_heads = jnp.einsum('hqe,hed->hqd', ctx.astype(compute_dtype), wfc_ref[...],
                         preferred_element_type=jnp.float32)  # (H, tq, d_model)
    o = jnp.sum(o_heads, axis=0) + residual                   # (tq, d_model) f32

    # LayerNorm (eps=1e-6), f32 math.
    mu = jnp.mean(o, axis=-1, keepdims=True)
    var = jnp.mean((o - mu) ** 2, axis=-1, keepdims=True)
    normed = (o - mu) * jax.lax.rsqrt(var + eps)
    out_ref[0] = (normed * gamma_ref[...] + beta_ref[...]).astype(out_ref.dtype)


def multi_head_attention(q, k, v, wq, wk, wv, wfc, gamma, beta, *,
                         n_head, d_k, d_v, return_attn=True,
                         compute_dtype=jnp.bfloat16, q_block=128):
    """q,k,v: (b, len, d_model) f32.  Projection weights are (in, out) = PyTorch weight.T."""
    b, lq, d_model = q.shape
    lk = k.shape[1]
    lv = v.shape[1]

    tq = lq if lq <= q_block else q_block
    assert lq % tq == 0, "len_q must be divisible by the q tile size"  # TODO(synk): ragged lq
    n_q_tiles = lq // tq

    # Head-major weight layout + compute-dtype cast (bf16 halves weight traffic, 2x MXU rate).
    wq_h = wq.reshape(d_model, n_head, d_k).transpose(1, 0, 2).astype(compute_dtype)
    wk_h = wk.reshape(d_model, n_head, d_k).transpose(1, 0, 2).astype(compute_dtype)
    wv_h = wv.reshape(d_model, n_head, d_v).transpose(1, 0, 2).astype(compute_dtype)
    wfc_h = wfc.reshape(n_head, d_v, d_model).astype(compute_dtype)

    kernel = functools.partial(_mha_kernel, n_head=n_head, d_k=d_k, d_v=d_v,
                               eps=1e-6, return_attn=return_attn,
                               compute_dtype=compute_dtype)

    out_shapes = [jax.ShapeDtypeStruct((b, lq, d_model), q.dtype)]
    out_specs = [pl.BlockSpec((1, tq, d_model), lambda bi, qi: (bi, qi, 0))]
    if return_attn:
        out_shapes.append(jax.ShapeDtypeStruct((b, n_head, lq, lk), jnp.float32))
        out_specs.append(pl.BlockSpec((1, n_head, tq, lk), lambda bi, qi: (bi, 0, qi, 0)))

    in_specs = [
        pl.BlockSpec((1, tq, d_model), lambda bi, qi: (bi, qi, 0)),       # q tile
        pl.BlockSpec((1, lk, d_model), lambda bi, qi: (bi, 0, 0)),        # k (full per batch)
        pl.BlockSpec((1, lv, d_model), lambda bi, qi: (bi, 0, 0)),        # v (full per batch)
        pl.BlockSpec((n_head, d_model, d_k), lambda bi, qi: (0, 0, 0)),   # wq (grid-invariant)
        pl.BlockSpec((n_head, d_model, d_k), lambda bi, qi: (0, 0, 0)),   # wk
        pl.BlockSpec((n_head, d_model, d_v), lambda bi, qi: (0, 0, 0)),   # wv
        pl.BlockSpec((n_head, d_v, d_model), lambda bi, qi: (0, 0, 0)),   # wfc
        pl.BlockSpec((1, d_model), lambda bi, qi: (0, 0)),                # LN gamma
        pl.BlockSpec((1, d_model), lambda bi, qi: (0, 0)),                # LN beta
    ]

    scratch_shapes = [
        pltpu.VMEM((n_head, tq, d_k), compute_dtype),   # Q heads
        pltpu.VMEM((n_head, lk, d_k), compute_dtype),   # K heads
        pltpu.VMEM((n_head, lv, d_v), compute_dtype),   # V heads
    ]

    outs = pl.pallas_call(
        kernel,
        out_shape=tuple(out_shapes),
        grid=(b, n_q_tiles),
        in_specs=in_specs,
        out_specs=tuple(out_specs),
        scratch_shapes=scratch_shapes,
        compiler_params=pltpu.CompilerParams(
            dimension_semantics=("parallel", "parallel")),
    )(q, k, v, wq_h, wk_h, wv_h, wfc_h, gamma, beta)

    if return_attn:
        return outs
    return outs[0]


def reference_mha(q, k, v, wq, wk, wv, wfc, gamma, beta, *, n_head, d_k, d_v):
    """Pure-JAX f32 reference mirroring the PyTorch forward (eval mode, mask=None)."""
    b, lq, d_model = q.shape
    residual = q
    Q = (q @ wq).reshape(b, lq, n_head, d_k).transpose(0, 2, 1, 3)
    K = (k @ wk).reshape(b, k.shape[1], n_head, d_k).transpose(0, 2, 1, 3)
    V = (v @ wv).reshape(b, v.shape[1], n_head, d_v).transpose(0, 2, 1, 3)
    scores = jnp.einsum('bhqd,bhkd->bhqk', Q / (d_k ** 0.5), K)
    attn = jax.nn.softmax(scores, axis=-1)
    o = jnp.einsum('bhqk,bhkd->bhqd', attn, V)
    o = o.transpose(0, 2, 1, 3).reshape(b, lq, n_head * d_v)
    o = o @ wfc + residual
    mu = o.mean(-1, keepdims=True)
    var = ((o - mu) ** 2).mean(-1, keepdims=True)
    o = (o - mu) / jnp.sqrt(var + 1e-6) * gamma[0] + beta[0]
    return o, attn


if __name__ == "__main__":
    # Small shapes consistent with the module.
    batch, seq, d_model = 2, 8, 32
    n_head, d_k, d_v = 4, 8, 8

    key = jax.random.PRNGKey(0)
    kq, kk, kv, kwq, kwk, kwv, kwfc = jax.random.split(key, 7)

    q = jax.random.normal(kq, (batch, seq, d_model), dtype=jnp.float32)
    k = jax.random.normal(kk, (batch, seq, d_model), dtype=jnp.float32)
    v = jax.random.normal(kv, (batch, seq, d_model), dtype=jnp.float32)

    # Deterministic parameter init (weights stored as (in, out) = PyTorch weight.T).
    s = 0.1
    wq = s * jax.random.normal(kwq, (d_model, n_head * d_k), dtype=jnp.float32)
    wk = s * jax.random.normal(kwk, (d_model, n_head * d_k), dtype=jnp.float32)
    wv = s * jax.random.normal(kwv, (d_model, n_head * d_v), dtype=jnp.float32)
    wfc = s * jax.random.normal(kwfc, (n_head * d_v, d_model), dtype=jnp.float32)
    gamma = jnp.ones((1, d_model), dtype=jnp.float32)   # LayerNorm weight
    beta = jnp.zeros((1, d_model), dtype=jnp.float32)   # LayerNorm bias

    # Full path (returns attention weights, like the PyTorch module).
    out, attn = multi_head_attention(q, k, v, wq, wk, wv, wfc, gamma, beta,
                                     n_head=n_head, d_k=d_k, d_v=d_v, return_attn=True)
    jax.block_until_ready((out, attn))

    # Bandwidth-lean path (attention weights not materialized).
    out_noattn = multi_head_attention(q, k, v, wq, wk, wv, wfc, gamma, beta,
                                      n_head=n_head, d_k=d_k, d_v=d_v, return_attn=False)
    jax.block_until_ready(out_noattn)

    ref_out, ref_attn = reference_mha(q, k, v, wq, wk, wv, wfc, gamma, beta,
                                      n_head=n_head, d_k=d_k, d_v=d_v)

    # Tolerances account for bf16 matmul inputs + approximate-reciprocal softmax vs f32 reference.
    assert jnp.allclose(out, ref_out, atol=5e-2, rtol=5e-2), "output mismatch"
    assert jnp.allclose(out_noattn, ref_out, atol=5e-2, rtol=5e-2), "output mismatch (no-attn path)"
    assert jnp.allclose(attn, ref_attn, atol=1e-2, rtol=1e-2), "attention-weights mismatch"

    print("KERNEL_OK")
</pallas_src>

<mosaic_0001>
module attributes {stable_mosaic.version = 11 : i64} {
  func.func @_mha_kernel(%arg0: i32, %arg1: i32, %arg2: memref<1x8x32xf32, #tpu.memory_space<vmem>>, %arg3: memref<1x8x32xf32, #tpu.memory_space<vmem>>, %arg4: memref<1x8x32xf32, #tpu.memory_space<vmem>>, %arg5: memref<4x32x8xbf16, #tpu.memory_space<vmem>>, %arg6: memref<4x32x8xbf16, #tpu.memory_space<vmem>>, %arg7: memref<4x32x8xbf16, #tpu.memory_space<vmem>>, %arg8: memref<4x8x32xbf16, #tpu.memory_space<vmem>>, %arg9: memref<1x32xf32, #tpu.memory_space<vmem>>, %arg10: memref<1x32xf32, #tpu.memory_space<vmem>>, %arg11: memref<1x8x32xf32, #tpu.memory_space<vmem>>, %arg12: memref<1x4x8x8xf32, #tpu.memory_space<vmem>>, %arg13: memref<4x8x8xbf16, #tpu.memory_space<vmem>>, %arg14: memref<4x8x8xbf16, #tpu.memory_space<vmem>>, %arg15: memref<4x8x8xbf16, #tpu.memory_space<vmem>>) attributes {dimension_semantics = [#tpu.dimension_semantics<parallel>, #tpu.dimension_semantics<parallel>], iteration_bounds = array<i64: 2, 1>, scalar_prefetch = 0 : i64, scratch_operands = 3 : i64, tpu.core_type = #tpu.core_type<tc>, window_params = [{transform_indices = @transform_0, window_bounds = array<i64: 1, 8, 32>}, {transform_indices = @transform_1, window_bounds = array<i64: 1, 8, 32>}, {transform_indices = @transform_2, window_bounds = array<i64: 1, 8, 32>}, {pipeline_mode = #tpu.pipeline_mode<synchronous>, transform_indices = @transform_3, window_bounds = array<i64: 4, 32, 8>}, {pipeline_mode = #tpu.pipeline_mode<synchronous>, transform_indices = @transform_4, window_bounds = array<i64: 4, 32, 8>}, {pipeline_mode = #tpu.pipeline_mode<synchronous>, transform_indices = @transform_5, window_bounds = array<i64: 4, 32, 8>}, {pipeline_mode = #tpu.pipeline_mode<synchronous>, transform_indices = @transform_6, window_bounds = array<i64: 4, 8, 32>}, {pipeline_mode = #tpu.pipeline_mode<synchronous>, transform_indices = @transform_7, window_bounds = array<i64: 1, 32>}, {pipeline_mode = #tpu.pipeline_mode<synchronous>, transform_indices = @transform_8, window_bounds = array<i64: 1, 32>}, {transform_indices = @transform_9, window_bounds = array<i64: 1, 8, 32>}, {transform_indices = @transform_10, window_bounds = array<i64: 1, 4, 8, 8>}]} {
    %c0 = arith.constant 0 : index
    %c0_0 = arith.constant 0 : index
    %c0_1 = arith.constant 0 : index
    %0 = vector.load %arg2[%c0, %c0_0, %c0_1] : memref<1x8x32xf32, #tpu.memory_space<vmem>>, vector<1x8x32xf32>
    %1 = vector.shape_cast %0 : vector<1x8x32xf32> to vector<8x32xf32>
    %c0_2 = arith.constant 0 : index
    %c0_3 = arith.constant 0 : index
    %c0_4 = arith.constant 0 : index
    %2 = vector.load %arg3[%c0_2, %c0_3, %c0_4] : memref<1x8x32xf32, #tpu.memory_space<vmem>>, vector<1x8x32xf32>
    %3 = vector.shape_cast %2 : vector<1x8x32xf32> to vector<8x32xf32>
    %c0_5 = arith.constant 0 : index
    %c0_6 = arith.constant 0 : index
    %c0_7 = arith.constant 0 : index
    %4 = vector.load %arg4[%c0_5, %c0_6, %c0_7] : memref<1x8x32xf32, #tpu.memory_space<vmem>>, vector<1x8x32xf32>
    %5 = vector.shape_cast %4 : vector<1x8x32xf32> to vector<8x32xf32>
    %6 = arith.truncf %1 : vector<8x32xf32> to vector<8x32xbf16>
    %7 = arith.truncf %3 : vector<8x32xf32> to vector<8x32xbf16>
    %8 = arith.truncf %5 : vector<8x32xf32> to vector<8x32xbf16>
    %c0_8 = arith.constant 0 : index
    %c0_9 = arith.constant 0 : index
    %c0_10 = arith.constant 0 : index
    %9 = vector.load %arg5[%c0_8, %c0_9, %c0_10] : memref<4x32x8xbf16, #tpu.memory_space<vmem>>, vector<1x32x8xbf16>
    %10 = vector.shape_cast %9 : vector<1x32x8xbf16> to vector<32x8xbf16>
    %cst = arith.constant dense<0.000000e+00> : vector<8x8xf32>
    %11 = tpu.matmul %6, %10, %cst {dimension_numbers = #tpu.dot_dimension_numbers<[1], [0], [0], [1], [0, 0, 1, 1], [], []>} : vector<8x32xbf16>, vector<32x8xbf16>, vector<8x8xf32> -> vector<8x8xf32>
    %cst_11 = arith.constant 0.353553385 : f32
    %12 = vector.broadcast %cst_11 : f32 to vector<8x8xf32>
    %13 = arith.mulf %11, %12 : vector<8x8xf32>
    %14 = arith.truncf %13 : vector<8x8xf32> to vector<8x8xbf16>
    %c0_12 = arith.constant 0 : index
    %c0_13 = arith.constant 0 : index
    %c0_14 = arith.constant 0 : index
    %15 = vector.load %arg13[%c0_12, %c0_13, %c0_14] : memref<4x8x8xbf16, #tpu.memory_space<vmem>>, vector<1x8x8xbf16>
    %16 = vector.shape_cast %15 : vector<1x8x8xbf16> to vector<8x8xbf16>
    %17 = vector.shape_cast %14 : vector<8x8xbf16> to vector<1x8x8xbf16>
    tpu.vector_store %arg13[%c0_12, %c0_13, %c0_14], %17 {strides = array<i32>} : memref<4x8x8xbf16, #tpu.memory_space<vmem>>, vector<1x8x8xbf16>,
    %c0_15 = arith.constant 0 : index
    %c0_16 = arith.constant 0 : index
    %c0_17 = arith.constant 0 : index
    %18 = vector.load %arg6[%c0_15, %c0_16, %c0_17] : memref<4x32x8xbf16, #tpu.memory_space<vmem>>, vector<1x32x8xbf16>
    %19 = vector.shape_cast %18 : vector<1x32x8xbf16> to vector<32x8xbf16>
    %cst_18 = arith.constant dense<0.000000e+00> : vector<8x8xf32>
    %20 = tpu.matmul %7, %19, %cst_18 {dimension_numbers = #tpu.dot_dimension_numbers<[1], [0], [0], [1], [0, 0, 1, 1], [], []>} : vector<8x32xbf16>, vector<32x8xbf16>, vector<8x8xf32> -> vector<8x8xf32>
    %21 = arith.truncf %20 : vector<8x8xf32> to vector<8x8xbf16>
    %c0_19 = arith.constant 0 : index
    %c0_20 = arith.constant 0 : index
    %c0_21 = arith.constant 0 : index
    %22 = vector.load %arg14[%c0_19, %c0_20, %c0_21] : memref<4x8x8xbf16, #tpu.memory_space<vmem>>, vector<1x8x8xbf16>
    %23 = vector.shape_cast %22 : vector<1x8x8xbf16> to vector<8x8xbf16>
    %24 = vector.shape_cast %21 : vector<8x8xbf16> to vector<1x8x8xbf16>
    tpu.vector_store %arg14[%c0_19, %c0_20, %c0_21], %24 {strides = array<i32>} : memref<4x8x8xbf16, #tpu.memory_space<vmem>>, vector<1x8x8xbf16>,
    %c0_22 = arith.constant 0 : index
    %c0_23 = arith.constant 0 : index
    %c0_24 = arith.constant 0 : index
    %25 = vector.load %arg7[%c0_22, %c0_23, %c0_24] : memref<4x32x8xbf16, #tpu.memory_space<vmem>>, vector<1x32x8xbf16>
    %26 = vector.shape_cast %25 : vector<1x32x8xbf16> to vector<32x8xbf16>
    %cst_25 = arith.constant dense<0.000000e+00> : vector<8x8xf32>
    %27 = tpu.matmul %8, %26, %cst_25 {dimension_numbers = #tpu.dot_dimension_numbers<[1], [0], [0], [1], [0, 0, 1, 1], [], []>} : vector<8x32xbf16>, vector<32x8xbf16>, vector<8x8xf32> -> vector<8x8xf32>
    %28 = arith.truncf %27 : vector<8x8xf32> to vector<8x8xbf16>
    %c0_26 = arith.constant 0 : index
    %c0_27 = arith.constant 0 : index
    %c0_28 = arith.constant 0 : index
    %29 = vector.load %arg15[%c0_26, %c0_27, %c0_28] : memref<4x8x8xbf16, #tpu.memory_space<vmem>>, vector<1x8x8xbf16>
    %30 = vector.shape_cast %29 : vector<1x8x8xbf16> to vector<8x8xbf16>
    %31 = vector.shape_cast %28 : vector<8x8xbf16> to vector<1x8x8xbf16>
    tpu.vector_store %arg15[%c0_26, %c0_27, %c0_28], %31 {strides = array<i32>} : memref<4x8x8xbf16, #tpu.memory_space<vmem>>, vector<1x8x8xbf16>,
    %c1 = arith.constant 1 : index
    %c0_29 = arith.constant 0 : index
    %c0_30 = arith.constant 0 : index
    %32 = vector.load %arg5[%c1, %c0_29, %c0_30] : memref<4x32x8xbf16, #tpu.memory_space<vmem>>, vector<1x32x8xbf16>
    %33 = vector.shape_cast %32 : vector<1x32x8xbf16> to vector<32x8xbf16>
    %cst_31 = arith.constant dense<0.000000e+00> : vector<8x8xf32>
    %34 = tpu.matmul %6, %33, %cst_31 {dimension_numbers = #tpu.dot_dimension_numbers<[1], [0], [0], [1], [0, 0, 1, 1], [], []>} : vector<8x32xbf16>, vector<32x8xbf16>, vector<8x8xf32> -> vector<8x8xf32>
    %cst_32 = arith.constant 0.353553385 : f32
    %35 = vector.broadcast %cst_32 : f32 to vector<8x8xf32>
    %36 = arith.mulf %34, %35 : vector<8x8xf32>
    %37 = arith.truncf %36 : vector<8x8xf32> to vector<8x8xbf16>
    %c1_33 = arith.constant 1 : index
    %c0_34 = arith.constant 0 : index
    %c0_35 = arith.constant 0 : index
    %38 = vector.load %arg13[%c1_33, %c0_34, %c0_35] : memref<4x8x8xbf16, #tpu.memory_space<vmem>>, vector<1x8x8xbf16>
    %39 = vector.shape_cast %38 : vector<1x8x8xbf16> to vector<8x8xbf16>
    %40 = vector.shape_cast %37 : vector<8x8xbf16> to vector<1x8x8xbf16>
    tpu.vector_store %arg13[%c1_33, %c0_34, %c0_35], %40 {strides = array<i32>} : memref<4x8x8xbf16, #tpu.memory_space<vmem>>, vector<1x8x8xbf16>,
    %c1_36 = arith.constant 1 : index
    %c0_37 = arith.constant 0 : index
    %c0_38 = arith.constant 0 : index
    %41 = vector.load %arg6[%c1_36, %c0_37, %c0_38] : memref<4x32x8xbf16, #tpu.memory_space<vmem>>, vector<1x32x8xbf16>
    %42 = vector.shape_cast %41 : vector<1x32x8xbf16> to vector<32x8xbf16>
    %cst_39 = arith.constant dense<0.000000e+00> : vector<8x8xf32>
    %43 = tpu.matmul %7, %42, %cst_39 {dimension_numbers = #tpu.dot_dimension_numbers<[1], [0], [0], [1], [0, 0, 1, 1], [], []>} : vector<8x32xbf16>, vector<32x8xbf16>, vector<8x8xf32> -> vector<8x8xf32>
    %44 = arith.truncf %43 : vector<8x8xf32> to vector<8x8xbf16>
    %c1_40 = arith.constant 1 : index
    %c0_41 = arith.constant 0 : index
    %c0_42 = arith.constant 0 : index
    %45 = vector.load %arg14[%c1_40, %c0_41, %c0_42] : memref<4x8x8xbf16, #tpu.memory_space<vmem>>, vector<1x8x8xbf16>
    %46 = vector.shape_cast %45 : vector<1x8x8xbf16> to vector<8x8xbf16>
    %47 = vector.shape_cast %44 : vector<8x8xbf16> to vector<1x8x8xbf16>
    tpu.vector_store %arg14[%c1_40, %c0_41, %c0_42], %47 {strides = array<i32>} : memref<4x8x8xbf16, #tpu.memory_space<vmem>>, vector<1x8x8xbf16>,
    %c1_43 = arith.constant 1 : index
    %c0_44 = arith.constant 0 : index
    %c0_45 = arith.constant 0 : index
    %48 = vector.load %arg7[%c1_43, %c0_44, %c0_45] : memref<4x32x8xbf16, #tpu.memory_space<vmem>>, vector<1x32x8xbf16>
    %49 = vector.shape_cast %48 : vector<1x32x8xbf16> to vector<32x8xbf16>
    %cst_46 = arith.constant dense<0.000000e+00> : vector<8x8xf32>
    %50 = tpu.matmul %8, %49, %cst_46 {dimension_numbers = #tpu.dot_dimension_numbers<[1], [0], [0], [1], [0, 0, 1, 1], [], []>} : vector<8x32xbf16>, vector<32x8xbf16>, vector<8x8xf32> -> vector<8x8xf32>
    %51 = arith.truncf %50 : vector<8x8xf32> to vector<8x8xbf16>
    %c1_47 = arith.constant 1 : index
    %c0_48 = arith.constant 0 : index
    %c0_49 = arith.constant 0 : index
    %52 = vector.load %arg15[%c1_47, %c0_48, %c0_49] : memref<4x8x8xbf16, #tpu.memory_space<vmem>>, vector<1x8x8xbf16>
    %53 = vector.shape_cast %52 : vector<1x8x8xbf16> to vector<8x8xbf16>
    %54 = vector.shape_cast %51 : vector<8x8xbf16> to vector<1x8x8xbf16>
    tpu.vector_store %arg15[%c1_47, %c0_48, %c0_49], %54 {strides = array<i32>} : memref<4x8x8xbf16, #tpu.memory_space<vmem>>, vector<1x8x8xbf16>,
    %c2 = arith.constant 2 : index
    %c0_50 = arith.constant 0 : index
    %c0_51 = arith.constant 0 : index
    %55 = vector.load %arg5[%c2, %c0_50, %c0_51] : memref<4x32x8xbf16, #tpu.memory_space<vmem>>, vector<1x32x8xbf16>
    %56 = vector.shape_cast %55 : vector<1x32x8xbf16> to vector<32x8xbf16>
    %cst_52 = arith.constant dense<0.000000e+00> : vector<8x8xf32>
    %57 = tpu.matmul %6, %56, %cst_52 {dimension_numbers = #tpu.dot_dimension_numbers<[1], [0], [0], [1], [0, 0, 1, 1], [], []>} : vector<8x32xbf16>, vector<32x8xbf16>, vector<8x8xf32> -> vector<8x8xf32>
    %cst_53 = arith.constant 0.353553385 : f32
    %58 = vector.broadcast %cst_53 : f32 to vector<8x8xf32>
    %59 = arith.mulf %57, %58 : vector<8x8xf32>
    %60 = arith.truncf %59 : vector<8x8xf32> to vector<8x8xbf16>
    %c2_54 = arith.constant 2 : index
    %c0_55 = arith.constant 0 : index
    %c0_56 = arith.constant 0 : index
    %61 = vector.load %arg13[%c2_54, %c0_55, %c0_56] : memref<4x8x8xbf16, #tpu.memory_space<vmem>>, vector<1x8x8xbf16>
    %62 = vector.shape_cast %61 : vector<1x8x8xbf16> to vector<8x8xbf16>
    %63 = vector.shape_cast %60 : vector<8x8xbf16> to vector<1x8x8xbf16>
    tpu.vector_store %arg13[%c2_54, %c0_55, %c0_56], %63 {strides = array<i32>} : memref<4x8x8xbf16, #tpu.memory_space<vmem>>, vector<1x8x8xbf16>,
    %c2_57 = arith.constant 2 : index
    %c0_58 = arith.constant 0 : index
    %c0_59 = arith.constant 0 : index
    %64 = vector.load %arg6[%c2_57, %c0_58, %c0_59] : memref<4x32x8xbf16, #tpu.memory_space<vmem>>, vector<1x32x8xbf16>
    %65 = vector.shape_cast %64 : vector<1x32x8xbf16> to vector<32x8xbf16>
    %cst_60 = arith.constant dense<0.000000e+00> : vector<8x8xf32>
    %66 = tpu.matmul %7, %65, %cst_60 {dimension_numbers = #tpu.dot_dimension_numbers<[1], [0], [0], [1], [0, 0, 1, 1], [], []>} : vector<8x32xbf16>, vector<32x8xbf16>, vector<8x8xf32> -> vector<8x8xf32>
    %67 = arith.truncf %66 : vector<8x8xf32> to vector<8x8xbf16>
    %c2_61 = arith.constant 2 : index
    %c0_62 = arith.constant 0 : index
    %c0_63 = arith.constant 0 : index
    %68 = vector.load %arg14[%c2_61, %c0_62, %c0_63] : memref<4x8x8xbf16, #tpu.memory_space<vmem>>, vector<1x8x8xbf16>
    %69 = vector.shape_cast %68 : vector<1x8x8xbf16> to vector<8x8xbf16>
    %70 = vector.shape_cast %67 : vector<8x8xbf16> to vector<1x8x8xbf16>
    tpu.vector_store %arg14[%c2_61, %c0_62, %c0_63], %70 {strides = array<i32>} : memref<4x8x8xbf16, #tpu.memory_space<vmem>>, vector<1x8x8xbf16>,
    %c2_64 = arith.constant 2 : index
    %c0_65 = arith.constant 0 : index
    %c0_66 = arith.constant 0 : index
    %71 = vector.load %arg7[%c2_64, %c0_65, %c0_66] : memref<4x32x8xbf16, #tpu.memory_space<vmem>>, vector<1x32x8xbf16>
    %72 = vector.shape_cast %71 : vector<1x32x8xbf16> to vector<32x8xbf16>
    %cst_67 = arith.constant dense<0.000000e+00> : vector<8x8xf32>
    %73 = tpu.matmul %8, %72, %cst_67 {dimension_numbers = #tpu.dot_dimension_numbers<[1], [0], [0], [1], [0, 0, 1, 1], [], []>} : vector<8x32xbf16>, vector<32x8xbf16>, vector<8x8xf32> -> vector<8x8xf32>
    %74 = arith.truncf %73 : vector<8x8xf32> to vector<8x8xbf16>
    %c2_68 = arith.constant 2 : index
    %c0_69 = arith.constant 0 : index
    %c0_70 = arith.constant 0 : index
    %75 = vector.load %arg15[%c2_68, %c0_69, %c0_70] : memref<4x8x8xbf16, #tpu.memory_space<vmem>>, vector<1x8x8xbf16>
    %76 = vector.shape_cast %75 : vector<1x8x8xbf16> to vector<8x8xbf16>
    %77 = vector.shape_cast %74 : vector<8x8xbf16> to vector<1x8x8xbf16>
    tpu.vector_store %arg15[%c2_68, %c0_69, %c0_70], %77 {strides = array<i32>} : memref<4x8x8xbf16, #tpu.memory_space<vmem>>, vector<1x8x8xbf16>,
    %c3 = arith.constant 3 : index
    %c0_71 = arith.constant 0 : index
    %c0_72 = arith.constant 0 : index
    %78 = vector.load %arg5[%c3, %c0_71, %c0_72] : memref<4x32x8xbf16, #tpu.memory_space<vmem>>, vector<1x32x8xbf16>
    %79 = vector.shape_cast %78 : vector<1x32x8xbf16> to vector<32x8xbf16>
    %cst_73 = arith.constant dense<0.000000e+00> : vector<8x8xf32>
    %80 = tpu.matmul %6, %79, %cst_73 {dimension_numbers = #tpu.dot_dimension_numbers<[1], [0], [0], [1], [0, 0, 1, 1], [], []>} : vector<8x32xbf16>, vector<32x8xbf16>, vector<8x8xf32> -> vector<8x8xf32>
    %cst_74 = arith.constant 0.353553385 : f32
    %81 = vector.broadcast %cst_74 : f32 to vector<8x8xf32>
    %82 = arith.mulf %80, %81 : vector<8x8xf32>
    %83 = arith.truncf %82 : vector<8x8xf32> to vector<8x8xbf16>
    %c3_75 = arith.constant 3 : index
    %c0_76 = arith.constant 0 : index
    %c0_77 = arith.constant 0 : index
    %84 = vector.load %arg13[%c3_75, %c0_76, %c0_77] : memref<4x8x8xbf16, #tpu.memory_space<vmem>>, vector<1x8x8xbf16>
    %85 = vector.shape_cast %84 : vector<1x8x8xbf16> to vector<8x8xbf16>
    %86 = vector.shape_cast %83 : vector<8x8xbf16> to vector<1x8x8xbf16>
    tpu.vector_store %arg13[%c3_75, %c0_76, %c0_77], %86 {strides = array<i32>} : memref<4x8x8xbf16, #tpu.memory_space<vmem>>, vector<1x8x8xbf16>,
    %c3_78 = arith.constant 3 : index
    %c0_79 = arith.constant 0 : index
    %c0_80 = arith.constant 0 : index
    %87 = vector.load %arg6[%c3_78, %c0_79, %c0_80] : memref<4x32x8xbf16, #tpu.memory_space<vmem>>, vector<1x32x8xbf16>
    %88 = vector.shape_cast %87 : vector<1x32x8xbf16> to vector<32x8xbf16>
    %cst_81 = arith.constant dense<0.000000e+00> : vector<8x8xf32>
    %89 = tpu.matmul %7, %88, %cst_81 {dimension_numbers = #tpu.dot_dimension_numbers<[1], [0], [0], [1], [0, 0, 1, 1], [], []>} : vector<8x32xbf16>, vector<32x8xbf16>, vector<8x8xf32> -> vector<8x8xf32>
    %90 = arith.truncf %89 : vector<8x8xf32> to vector<8x8xbf16>
    %c3_82 = arith.constant 3 : index
    %c0_83 = arith.constant 0 : index
    %c0_84 = arith.constant 0 : index
    %91 = vector.load %arg14[%c3_82, %c0_83, %c0_84] : memref<4x8x8xbf16, #tpu.memory_space<vmem>>, vector<1x8x8xbf16>
    %92 = vector.shape_cast %91 : vector<1x8x8xbf16> to vector<8x8xbf16>
    %93 = vector.shape_cast %90 : vector<8x8xbf16> to vector<1x8x8xbf16>
    tpu.vector_store %arg14[%c3_82, %c0_83, %c0_84], %93 {strides = array<i32>} : memref<4x8x8xbf16, #tpu.memory_space<vmem>>, vector<1x8x8xbf16>,
    %c3_85 = arith.constant 3 : index
    %c0_86 = arith.constant 0 : index
    %c0_87 = arith.constant 0 : index
    %94 = vector.load %arg7[%c3_85, %c0_86, %c0_87] : memref<4x32x8xbf16, #tpu.memory_space<vmem>>, vector<1x32x8xbf16>
    %95 = vector.shape_cast %94 : vector<1x32x8xbf16> to vector<32x8xbf16>
    %cst_88 = arith.constant dense<0.000000e+00> : vector<8x8xf32>
    %96 = tpu.matmul %8, %95, %cst_88 {dimension_numbers = #tpu.dot_dimension_numbers<[1], [0], [0], [1], [0, 0, 1, 1], [], []>} : vector<8x32xbf16>, vector<32x8xbf16>, vector<8x8xf32> -> vector<8x8xf32>
    %97 = arith.truncf %96 : vector<8x8xf32> to vector<8x8xbf16>
    %c3_89 = arith.constant 3 : index
    %c0_90 = arith.constant 0 : index
    %c0_91 = arith.constant 0 : index
    %98 = vector.load %arg15[%c3_89, %c0_90, %c0_91] : memref<4x8x8xbf16, #tpu.memory_space<vmem>>, vector<1x8x8xbf16>
    %99 = vector.shape_cast %98 : vector<1x8x8xbf16> to vector<8x8xbf16>
    %100 = vector.shape_cast %97 : vector<8x8xbf16> to vector<1x8x8xbf16>
    tpu.vector_store %arg15[%c3_89, %c0_90, %c0_91], %100 {strides = array<i32>} : memref<4x8x8xbf16, #tpu.memory_space<vmem>>, vector<1x8x8xbf16>,
    %c0_92 = arith.constant 0 : index
    %c0_93 = arith.constant 0 : index
    %c0_94 = arith.constant 0 : index
    %101 = vector.load %arg13[%c0_92, %c0_93, %c0_94] : memref<4x8x8xbf16, #tpu.memory_space<vmem>>, vector<4x8x8xbf16>
    %c0_95 = arith.constant 0 : index
    %c0_96 = arith.constant 0 : index
    %c0_97 = arith.constant 0 : index
    %102 = vector.load %arg14[%c0_95, %c0_96, %c0_97] : memref<4x8x8xbf16, #tpu.memory_space<vmem>>, vector<4x8x8xbf16>
    %c0_98 = arith.constant 0 : index
    %c0_99 = arith.constant 0 : index
    %c0_100 = arith.constant 0 : index
    %103 = vector.load %arg15[%c0_98, %c0_99, %c0_100] : memref<4x8x8xbf16, #tpu.memory_space<vmem>>, vector<4x8x8xbf16>
    "tpu.trace_start"() <{level = 10 : i32, message = "hqd,hkd->hqk"}> : () -> ()
    %cst_101 = arith.constant dense<0.000000e+00> : vector<4x8x8xf32>
    %104 = tpu.matmul %101, %102, %cst_101 {dimension_numbers = #tpu.dot_dimension_numbers<[2], [2], [1], [1], [0, 0, 0, 1, 1, 1], [0], [0]>} : vector<4x8x8xbf16>, vector<4x8x8xbf16>, vector<4x8x8xf32> -> vector<4x8x8xf32>
    "tpu.trace_stop"() : () -> ()
    %cst_102 = arith.constant dense<0xFF800000> : vector<4x8xf32>
    %105 = vector.multi_reduction <maximumf>, %104, %cst_102 [2] : vector<4x8x8xf32> to vector<4x8xf32>
    %106 = vector.shape_cast %105 : vector<4x8xf32> to vector<4x8x1xf32>
    %107 = vector.broadcast %106 : vector<4x8x1xf32> to vector<4x8x8xf32>
    %108 = arith.subf %104, %107 : vector<4x8x8xf32>
    %109 = math.exp %108 : vector<4x8x8xf32>
    %cst_103 = arith.constant dense<0.000000e+00> : vector<4x8xf32>
    %110 = vector.multi_reduction <add>, %109, %cst_103 [2] : vector<4x8x8xf32> to vector<4x8xf32>
    %111 = vector.shape_cast %110 : vector<4x8xf32> to vector<4x8x1xf32>
    %112 = tpu.reciprocal %111 {approx = true} : vector<4x8x1xf32> -> vector<4x8x1xf32>
    %113 = vector.broadcast %112 : vector<4x8x1xf32> to vector<4x8x8xf32>
    %114 = arith.mulf %109, %113 : vector<4x8x8xf32>
    %c0_104 = arith.constant 0 : index
    %c0_105 = arith.constant 0 : index
    %c0_106 = arith.constant 0 : index
    %c0_107 = arith.constant 0 : index
    %115 = vector.load %arg12[%c0_104, %c0_105, %c0_106, %c0_107] : memref<1x4x8x8xf32, #tpu.memory_space<vmem>>, vector<1x4x8x8xf32>
    %116 = vector.shape_cast %115 : vector<1x4x8x8xf32> to vector<4x8x8xf32>
    %117 = vector.shape_cast %114 : vector<4x8x8xf32> to vector<1x4x8x8xf32>
    tpu.vector_store %arg12[%c0_104, %c0_105, %c0_106, %c0_107], %117 {strides = array<i32>} : memref<1x4x8x8xf32, #tpu.memory_space<vmem>>, vector<1x4x8x8xf32>,
    %118 = arith.truncf %114 : vector<4x8x8xf32> to vector<4x8x8xbf16>
    "tpu.trace_start"() <{level = 10 : i32, message = "hqk,hkd->hqd"}> : () -> ()
    %cst_108 = arith.constant dense<0.000000e+00> : vector<4x8x8xf32>
    %119 = tpu.matmul %118, %103, %cst_108 {dimension_numbers = #tpu.dot_dimension_numbers<[2], [1], [1], [2], [0, 0, 0, 1, 1, 2], [0], [0]>} : vector<4x8x8xbf16>, vector<4x8x8xbf16>, vector<4x8x8xf32> -> vector<4x8x8xf32>
    "tpu.trace_stop"() : () -> ()
    %120 = arith.truncf %119 : vector<4x8x8xf32> to vector<4x8x8xbf16>
    %c0_109 = arith.constant 0 : index
    %c0_110 = arith.constant 0 : index
    %c0_111 = arith.constant 0 : index
    %121 = vector.load %arg8[%c0_109, %c0_110, %c0_111] : memref<4x8x32xbf16, #tpu.memory_space<vmem>>, vector<4x8x32xbf16>
    "tpu.trace_start"() <{level = 10 : i32, message = "hqe,hed->hqd"}> : () -> ()
    %cst_112 = arith.constant dense<0.000000e+00> : vector<4x8x32xf32>
    %122 = tpu.matmul %120, %121, %cst_112 {dimension_numbers = #tpu.dot_dimension_numbers<[2], [1], [1], [2], [0, 0, 0, 1, 1, 2], [0], [0]>} : vector<4x8x8xbf16>, vector<4x8x32xbf16>, vector<4x8x32xf32> -> vector<4x8x32xf32>
    "tpu.trace_stop"() : () -> ()
    %cst_113 = arith.constant dense<0.000000e+00> : vector<8x32xf32>
    %123 = vector.multi_reduction <add>, %122, %cst_113 [0] : vector<4x8x32xf32> to vector<8x32xf32>
    %124 = arith.addf %123, %1 : vector<8x32xf32>
    %cst_114 = arith.constant dense<0.000000e+00> : vector<8xf32>
    %125 = vector.multi_reduction <add>, %124, %cst_114 [1] : vector<8x32xf32> to vector<8xf32>
    %126 = vector.shape_cast %125 : vector<8xf32> to vector<8x1xf32>
    %cst_115 = arith.constant 3.200000e+01 : f32
    %127 = vector.broadcast %cst_115 : f32 to vector<8x1xf32>
    %128 = arith.divf %126, %127 : vector<8x1xf32>
    %129 = vector.broadcast %128 : vector<8x1xf32> to vector<8x32xf32>
    %130 = arith.subf %124, %129 : vector<8x32xf32>
    %131 = arith.mulf %130, %130 : vector<8x32xf32>
    %cst_116 = arith.constant dense<0.000000e+00> : vector<8xf32>
    %132 = vector.multi_reduction <add>, %131, %cst_116 [1] : vector<8x32xf32> to vector<8xf32>
    %133 = vector.shape_cast %132 : vector<8xf32> to vector<8x1xf32>
    %cst_117 = arith.constant 3.200000e+01 : f32
    %134 = vector.broadcast %cst_117 : f32 to vector<8x1xf32>
    %135 = arith.divf %133, %134 : vector<8x1xf32>
    %136 = vector.broadcast %128 : vector<8x1xf32> to vector<8x32xf32>
    %137 = arith.subf %124, %136 : vector<8x32xf32>
    %cst_118 = arith.constant 9.99999997E-7 : f32
    %138 = vector.broadcast %cst_118 : f32 to vector<8x1xf32>
    %139 = arith.addf %135, %138 : vector<8x1xf32>
    %140 = math.rsqrt %139 : vector<8x1xf32>
    %141 = vector.broadcast %140 : vector<8x1xf32> to vector<8x32xf32>
    %142 = arith.mulf %137, %141 : vector<8x32xf32>
    %c0_119 = arith.constant 0 : index
    %c0_120 = arith.constant 0 : index
    %143 = vector.load %arg9[%c0_119, %c0_120] : memref<1x32xf32, #tpu.memory_space<vmem>>, vector<1x32xf32>
    %144 = vector.broadcast %143 : vector<1x32xf32> to vector<8x32xf32>
    %145 = arith.mulf %142, %144 : vector<8x32xf32>
    %c0_121 = arith.constant 0 : index
    %c0_122 = arith.constant 0 : index
    %146 = vector.load %arg10[%c0_121, %c0_122] : memref<1x32xf32, #tpu.memory_space<vmem>>, vector<1x32xf32>
    %147 = vector.broadcast %146 : vector<1x32xf32> to vector<8x32xf32>
    %148 = arith.addf %145, %147 : vector<8x32xf32>
    %c0_123 = arith.constant 0 : index
    %c0_124 = arith.constant 0 : index
    %c0_125 = arith.constant 0 : index
    %149 = vector.load %arg11[%c0_123, %c0_124, %c0_125] : memref<1x8x32xf32, #tpu.memory_space<vmem>>, vector<1x8x32xf32>
    %150 = vector.shape_cast %149 : vector<1x8x32xf32> to vector<8x32xf32>
    %151 = vector.shape_cast %148 : vector<8x32xf32> to vector<1x8x32xf32>
    tpu.vector_store %arg11[%c0_123, %c0_124, %c0_125], %151 {strides = array<i32>} : memref<1x8x32xf32, #tpu.memory_space<vmem>>, vector<1x8x32xf32>,
    return
  }
  func.func @transform_0(%arg0: i32, %arg1: i32) -> (i32, i32, i32) {
    %c0_i32 = arith.constant 0 : i32
    %c0_i32_0 = arith.constant 0 : i32
    return %arg0, %arg1, %c0_i32 : i32, i32, i32
  }
  func.func @transform_1(%arg0: i32, %arg1: i32) -> (i32, i32, i32) {
    %c0_i32 = arith.constant 0 : i32
    %c0_i32_0 = arith.constant 0 : i32
    %c0_i32_1 = arith.constant 0 : i32
    return %arg0, %c0_i32, %c0_i32_0 : i32, i32, i32
  }
  func.func @transform_2(%arg0: i32, %arg1: i32) -> (i32, i32, i32) {
    %c0_i32 = arith.constant 0 : i32
    %c0_i32_0 = arith.constant 0 : i32
    %c0_i32_1 = arith.constant 0 : i32
    return %arg0, %c0_i32, %c0_i32_0 : i32, i32, i32
  }
  func.func @transform_3(%arg0: i32, %arg1: i32) -> (i32, i32, i32) {
    %c0_i32 = arith.constant 0 : i32
    %c0_i32_0 = arith.constant 0 : i32
    %c0_i32_1 = arith.constant 0 : i32
    %c0_i32_2 = arith.constant 0 : i32
    return %c0_i32, %c0_i32_0, %c0_i32_1 : i32, i32, i32
  }
  func.func @transform_4(%arg0: i32, %arg1: i32) -> (i32, i32, i32) {
    %c0_i32 = arith.constant 0 : i32
    %c0_i32_0 = arith.constant 0 : i32
    %c0_i32_1 = arith.constant 0 : i32
    %c0_i32_2 = arith.constant 0 : i32
    return %c0_i32, %c0_i32_0, %c0_i32_1 : i32, i32, i32
  }
  func.func @transform_5(%arg0: i32, %arg1: i32) -> (i32, i32, i32) {
    %c0_i32 = arith.constant 0 : i32
    %c0_i32_0 = arith.constant 0 : i32
    %c0_i32_1 = arith.constant 0 : i32
    %c0_i32_2 = arith.constant 0 : i32
    return %c0_i32, %c0_i32_0, %c0_i32_1 : i32, i32, i32
  }
  func.func @transform_6(%arg0: i32, %arg1: i32) -> (i32, i32, i32) {
    %c0_i32 = arith.constant 0 : i32
    %c0_i32_0 = arith.constant 0 : i32
    %c0_i32_1 = arith.constant 0 : i32
    %c0_i32_2 = arith.constant 0 : i32
    return %c0_i32, %c0_i32_0, %c0_i32_1 : i32, i32, i32
  }
  func.func @transform_7(%arg0: i32, %arg1: i32) -> (i32, i32) {
    %c0_i32 = arith.constant 0 : i32
    %c0_i32_0 = arith.constant 0 : i32
    %c0_i32_1 = arith.constant 0 : i32
    return %c0_i32, %c0_i32_0 : i32, i32
  }
  func.func @transform_8(%arg0: i32, %arg1: i32) -> (i32, i32) {
    %c0_i32 = arith.constant 0 : i32
    %c0_i32_0 = arith.constant 0 : i32
    %c0_i32_1 = arith.constant 0 : i32
    return %c0_i32, %c0_i32_0 : i32, i32
  }
  func.func @transform_9(%arg0: i32, %arg1: i32) -> (i32, i32, i32) {
    %c0_i32 = arith.constant 0 : i32
    %c0_i32_0 = arith.constant 0 : i32
    return %arg0, %arg1, %c0_i32 : i32, i32, i32
  }
  func.func @transform_10(%arg0: i32, %arg1: i32) -> (i32, i32, i32, i32) {
    %c0_i32 = arith.constant 0 : i32
    %c0_i32_0 = arith.constant 0 : i32
    %c0_i32_1 = arith.constant 0 : i32
    return %arg0, %c0_i32, %arg1, %c0_i32_0 : i32, i32, i32, i32
  }
}

</mosaic_0001>

<llo_original>
// kernel: tpu_custom_call.1
$region0: #{tpu_custom_call.1}
  #allocation0 [shape = 'u32[]', space=smem, size = 0x4, offset = 0x4, fixed_abs, tag = 'smem constant byte address 0x4 - core index']
  #allocation1 [shape = 'u32[144,128]{1,0:T(1,128)}', space=vmem, size = 0x12000, scoped, tag = 'internal scratch']
  #allocation2 [shape = 'bf16[4,8,8]{2,1,0:T(8,128)(2,1)}', space=vmem, size = 0x2000, scoped, tag = 'scratch operand']
  #allocation3 [shape = 'bf16[4,8,8]{2,1,0:T(8,128)(2,1)}', space=vmem, size = 0x2000, scoped, tag = 'scratch operand']
  #allocation4 [shape = 'bf16[4,8,8]{2,1,0:T(8,128)(2,1)}', space=vmem, size = 0x2000, scoped, tag = 'scratch operand']
  %s0 = inlined_call_operand.vmem [shape: f32[2,8,32], index: 0, kind: input, shape index: {}]
  %s1 = inlined_call_operand.vmem [shape: f32[2,8,32], index: 1, kind: input, shape index: {}]
  %s2 = inlined_call_operand.vmem [shape: f32[2,8,32], index: 2, kind: input, shape index: {}]
  %s3 = inlined_call_operand.vmem [shape: bf16[4,32,8], index: 3, kind: input, shape index: {}]
  %s4 = inlined_call_operand.vmem [shape: bf16[4,32,8], index: 4, kind: input, shape index: {}]
  %s5 = inlined_call_operand.vmem [shape: bf16[4,32,8], index: 5, kind: input, shape index: {}]
  %s6 = inlined_call_operand.vmem [shape: bf16[4,8,32], index: 6, kind: input, shape index: {}]
  %s7 = inlined_call_operand.vmem [shape: f32[1,32], index: 7, kind: input, shape index: {}]
  %s8 = inlined_call_operand.vmem [shape: f32[1,32], index: 8, kind: input, shape index: {}]
  %s9 = inlined_call_operand.hbm [shape: f32[2,8,32], index: 9, kind: output, shape index: {0}]
  %s10 = inlined_call_operand.hbm [shape: f32[2,4,8,8], index: 10, kind: output, shape index: {1}]
  %11 = xla_tuple %s9, %s10
  %s12 = sld [smem:[#allocation0]]
  $region77: #{tpu_custom_call.1} parent=0
    _
  %s14 = ssub.s32 1, %s12
  %s15 = scalar_select 0, %s14, %s12
  $region1: #{tpu_custom_call.1} parent=0
    #allocation5 [shape = 'u8[8192]{0}', space=vmem, size = 0x2000, scoped, tag = 'output window, operand 0']
    #allocation6 [shape = 's32[2]{0}', space=sflag, size = 0x8, scoped, tag = 'scoped memory for tpu_custom_call.1']
    #allocation7 [shape = 'u8[32768]{0}', space=vmem, size = 0x8000, scoped, tag = 'output window, operand 1']
    #allocation8 [shape = 's32[2]{0}', space=sflag, size = 0x8, scoped, tag = 'scoped memory for tpu_custom_call.1']
    %16 = vsyncpa [#allocation6], 0
    %s17 = scalar_lea.sflag [#allocation6], 1
    %18 = vsyncpa %s17, 0
    %19 = vsyncpa [#allocation8], 0
    %s20 = scalar_lea.sflag [#allocation8], 1
    %21 = vsyncpa %s20, 0
    loop: start=0, step=1, limit=4
    $region2: #{tpu_custom_call.1} parent=1 // loop_pre_header
      _
    $region3: #{tpu_custom_call.1} parent=1 // loop_header
      %s23 = sphi 0, %s27
      %p24 = scmp.ge.s32.totalorder %s23, 4
      %s30 = sphi 0, %s42
      %s31 = sphi 0, %s38
      %s32 = sphi 0, %s30
      %s33 = sphi 0, %s31
      %s34 = sphi 0, %s32
      %s35 = sphi 0, %s33
      %s47 = sphi 0, %s49
      %s50 = sphi 0, %s47
      %s51 = sphi 0, %s50
      %s67 = sphi 0, %s51
      %s73 = sphi 0, %s75
      %s76 = sphi 0, %s73
      %s77 = sphi 0, %s76
      %s93 = sphi 0, %s77
      %s99 = sphi 0, %s101
      %s102 = sphi 0, %s99
      %s103 = sphi 0, %s102
      %s119 = sphi 0, %s103
      %s123 = sphi 0, %s123
      %s125 = sphi 0, %s123
      %s126 = sphi 0, %s125
      %s140 = sphi 0, %s126
      %s144 = sphi 0, %s144
      %s146 = sphi 0, %s144
      %s147 = sphi 0, %s146
      %s161 = sphi 0, %s147
      %s165 = sphi 0, %s165
      %s167 = sphi 0, %s165
      %s168 = sphi 0, %s167
      %s182 = sphi 0, %s168
      %s186 = sphi 0, %s186
      %s188 = sphi 0, %s186
      %s189 = sphi 0, %s188
      %s203 = sphi 0, %s189
      %s207 = sphi 0, %s207
      %s209 = sphi 0, %s207
      %s210 = sphi 0, %s209
      %s224 = sphi 0, %s210
      %s228 = sphi 0, %s228
      %s230 = sphi 0, %s228
      %s231 = sphi 0, %s230
      %s245 = sphi 0, %s231
      %s253 = sphi 0, %s255
      %s256 = sphi 0, %s253
      %s257 = sphi 0, %s256
      %s273 = sphi 0, %s257
      %s281 = sphi 0, %s283
      %s284 = sphi 0, %s281
      %s285 = sphi 0, %s284
      %s301 = sphi 0, %s285
    $region4: #{tpu_custom_call.1} parent=1 // loop_header_branch
      %26 = sbr.rel (%p24) target = $region8
    $region5: #{tpu_custom_call.1} parent=1 // loop_body
      %s28 = ssub.s32 %s23, 1
      %s29 = ssub.s32 %s23, 2
      %s36 = sadd.s32 1, %s31
      %p37 = scmp.ge.s32.totalorder %s36, 1
      %s38 = scalar_select %p37, 0, %s36
      %s39 = sadd.s32 1, %s30
      %s40 = scalar_select %p37, %s39, %s30
      %p41 = scmp.ge.s32.totalorder %s40, 2
      %s42 = scalar_select %p41, 0, %s40
      %s43 = ssub.s32 %s30, %s42
      %s44 = ssub.s32 %s31, %s38
      %s45 = sor.u32 %s43, %s44
      %p46 = scmp.eq.s32.totalorder %s45, 0
      %s48 = sadd.s32 %s47, 1
      %s49 = scalar_select %p46, %s47, %s48
      %p52 = pneg %p46
      %p53 = scmp.eq.s32.totalorder %s23, 1
      %p54 = por %p52, %p53
      %p55 = scmp.ne.s32.totalorder %s47, %s50
      %p56 = scmp.eq.s32.totalorder %s23, 0
      %p57 = por %p55, %p56
      %p58 = scmp.ne.s32.totalorder %s47, %s50
      %p59 = scmp.eq.s32.totalorder %s28, 1
      %p60 = por %p58, %p59
      %p61 = scmp.ne.s32.totalorder %s50, %s51
      %p62 = scmp.eq.s32.totalorder %s28, 0
      %p63 = por %p61, %p62
      %p64 = scmp.ne.s32.totalorder %s50, %s51
      %p65 = scmp.eq.s32.totalorder %s29, 1
      %p66 = por %p64, %p65
      %p68 = scmp.ne.s32.totalorder %s51, %s67
      %p69 = scmp.eq.s32.totalorder %s29, 0
      %p70 = por %p68, %p69
      %s71 = ssub.s32 %s30, %s42
      %p72 = scmp.eq.s32.totalorder %s71, 0
      %s74 = sadd.s32 %s73, 1
      %s75 = scalar_select %p72, %s73, %s74
      %p78 = pneg %p72
      %p79 = scmp.eq.s32.totalorder %s23, 1
      %p80 = por %p78, %p79
      %p81 = scmp.ne.s32.totalorder %s73, %s76
      %p82 = scmp.eq.s32.totalorder %s23, 0
      %p83 = por %p81, %p82
      %p84 = scmp.ne.s32.totalorder %s73, %s76
      %p85 = scmp.eq.s32.totalorder %s28, 1
      %p86 = por %p84, %p85
      %p87 = scmp.ne.s32.totalorder %s76, %s77
      %p88 = scmp.eq.s32.totalorder %s28, 0
      %p89 = por %p87, %p88
      %p90 = scmp.ne.s32.totalorder %s76, %s77
      %p91 = scmp.eq.s32.totalorder %s29, 1
      %p92 = por %p90, %p91
      %p94 = scmp.ne.s32.totalorder %s77, %s93
      %p95 = scmp.eq.s32.totalorder %s29, 0
      %p96 = por %p94, %p95
      %s97 = ssub.s32 %s30, %s42
      %p98 = scmp.eq.s32.totalorder %s97, 0
      %s100 = sadd.s32 %s99, 1
      %s101 = scalar_select %p98, %s99, %s100
      %p104 = pneg %p98
      %p105 = scmp.eq.s32.totalorder %s23, 1
      %p106 = por %p104, %p105
      %p107 = scmp.ne.s32.totalorder %s99, %s102
      %p108 = scmp.eq.s32.totalorder %s23, 0
      %p109 = por %p107, %p108
      %p110 = scmp.ne.s32.totalorder %s99, %s102
      %p111 = scmp.eq.s32.totalorder %s28, 1
      %p112 = por %p110, %p111
      %p113 = scmp.ne.s32.totalorder %s102, %s103
      %p114 = scmp.eq.s32.totalorder %s28, 0
      %p115 = por %p113, %p114
      %p116 = scmp.ne.s32.totalorder %s102, %s103
      %p117 = scmp.eq.s32.totalorder %s29, 1
      %p118 = por %p116, %p117
      %p120 = scmp.ne.s32.totalorder %s103, %s119
      %p121 = scmp.eq.s32.totalorder %s29, 0
      %p122 = por %p120, %p121
      %s124 = sadd.s32 %s123, 1
      %p127 = scmp.eq.s32.totalorder %s23, 1
      %p128 = scmp.ne.s32.totalorder %s123, %s125
      %p129 = scmp.eq.s32.totalorder %s23, 0
      %p130 = por %p128, %p129
      %p131 = scmp.ne.s32.totalorder %s123, %s125
      %p132 = scmp.eq.s32.totalorder %s28, 1
      %p133 = por %p131, %p132
      %p134 = scmp.ne.s32.totalorder %s125, %s126
      %p135 = scmp.eq.s32.totalorder %s28, 0
      %p136 = por %p134, %p135
      %p137 = scmp.ne.s32.totalorder %s125, %s126
      %p138 = scmp.eq.s32.totalorder %s29, 1
      %p139 = por %p137, %p138
      %p141 = scmp.ne.s32.totalorder %s126, %s140
      %p142 = scmp.eq.s32.totalorder %s29, 0
      %p143 = por %p141, %p142
      %s145 = sadd.s32 %s144, 1
      %p148 = scmp.eq.s32.totalorder %s23, 1
      %p149 = scmp.ne.s32.totalorder %s144, %s146
      %p150 = scmp.eq.s32.totalorder %s23, 0
      %p151 = por %p149, %p150
      %p152 = scmp.ne.s32.totalorder %s144, %s146
      %p153 = scmp.eq.s32.totalorder %s28, 1
      %p154 = por %p152, %p153
      %p155 = scmp.ne.s32.totalorder %s146, %s147
      %p156 = scmp.eq.s32.totalorder %s28, 0
      %p157 = por %p155, %p156
      %p158 = scmp.ne.s32.totalorder %s146, %s147
      %p159 = scmp.eq.s32.totalorder %s29, 1
      %p160 = por %p158, %p159
      %p162 = scmp.ne.s32.totalorder %s147, %s161
      %p163 = scmp.eq.s32.totalorder %s29, 0
      %p164 = por %p162, %p163
      %s166 = sadd.s32 %s165, 1
      %p169 = scmp.eq.s32.totalorder %s23, 1
      %p170 = scmp.ne.s32.totalorder %s165, %s167
      %p171 = scmp.eq.s32.totalorder %s23, 0
      %p172 = por %p170, %p171
      %p173 = scmp.ne.s32.totalorder %s165, %s167
      %p174 = scmp.eq.s32.totalorder %s28, 1
      %p175 = por %p173, %p174
      %p176 = scmp.ne.s32.totalorder %s167, %s168
      %p177 = scmp.eq.s32.totalorder %s28, 0
      %p178 = por %p176, %p177
      %p179 = scmp.ne.s32.totalorder %s167, %s168
      %p180 = scmp.eq.s32.totalorder %s29, 1
      %p181 = por %p179, %p180
      %p183 = scmp.ne.s32.totalorder %s168, %s182
      %p184 = scmp.eq.s32.totalorder %s29, 0
      %p185 = por %p183, %p184
      %s187 = sadd.s32 %s186, 1
      %p190 = scmp.eq.s32.totalorder %s23, 1
      %p191 = scmp.ne.s32.totalorder %s186, %s188
      %p192 = scmp.eq.s32.totalorder %s23, 0
      %p193 = por %p191, %p192
      %p194 = scmp.ne.s32.totalorder %s186, %s188
      %p195 = scmp.eq.s32.totalorder %s28, 1
      %p196 = por %p194, %p195
      %p197 = scmp.ne.s32.totalorder %s188, %s189
      %p198 = scmp.eq.s32.totalorder %s28, 0
      %p199 = por %p197, %p198
      %p200 = scmp.ne.s32.totalorder %s188, %s189
      %p201 = scmp.eq.s32.totalorder %s29, 1
      %p202 = por %p200, %p201
      %p204 = scmp.ne.s32.totalorder %s189, %s203
      %p205 = scmp.eq.s32.totalorder %s29, 0
      %p206 = por %p204, %p205
      %s208 = sadd.s32 %s207, 1
      %p211 = scmp.eq.s32.totalorder %s23, 1
      %p212 = scmp.ne.s32.totalorder %s207, %s209
      %p213 = scmp.eq.s32.totalorder %s23, 0
      %p214 = por %p212, %p213
      %p215 = scmp.ne.s32.totalorder %s207, %s209
      %p216 = scmp.eq.s32.totalorder %s28, 1
      %p217 = por %p215, %p216
      %p218 = scmp.ne.s32.totalorder %s209, %s210
      %p219 = scmp.eq.s32.totalorder %s28, 0
      %p220 = por %p218, %p219
      %p221 = scmp.ne.s32.totalorder %s209, %s210
      %p222 = scmp.eq.s32.totalorder %s29, 1
      %p223 = por %p221, %p222
      %p225 = scmp.ne.s32.totalorder %s210, %s224
      %p226 = scmp.eq.s32.totalorder %s29, 0
      %p227 = por %p225, %p226
      %s229 = sadd.s32 %s228, 1
      %p232 = scmp.eq.s32.totalorder %s23, 1
      %p233 = scmp.ne.s32.totalorder %s228, %s230
      %p234 = scmp.eq.s32.totalorder %s23, 0
      %p235 = por %p233, %p234
      %p236 = scmp.ne.s32.totalorder %s228, %s230
      %p237 = scmp.eq.s32.totalorder %s28, 1
      %p238 = por %p236, %p237
      %p239 = scmp.ne.s32.totalorder %s230, %s231
      %p240 = scmp.eq.s32.totalorder %s28, 0
      %p241 = por %p239, %p240
      %p242 = scmp.ne.s32.totalorder %s230, %s231
      %p243 = scmp.eq.s32.totalorder %s29, 1
      %p244 = por %p242, %p243
      %p246 = scmp.ne.s32.totalorder %s231, %s245
      %p247 = scmp.eq.s32.totalorder %s29, 0
      %p248 = por %p246, %p247
      %s249 = ssub.s32 %s30, %s42
      %s250 = ssub.s32 %s31, %s38
      %s251 = sor.u32 %s249, %s250
      %p252 = scmp.eq.s32.totalorder %s251, 0
      %s254 = sadd.s32 %s253, 1
      %s255 = scalar_select %p252, %s253, %s254
      %p258 = pneg %p252
      %p259 = scmp.eq.s32.totalorder %s23, 1
      %p260 = por %p258, %p259
      %p261 = scmp.ne.s32.totalorder %s253, %s256
      %p262 = scmp.eq.s32.totalorder %s23, 0
      %p263 = por %p261, %p262
      %p264 = scmp.ne.s32.totalorder %s253, %s256
      %p265 = scmp.eq.s32.totalorder %s28, 1
      %p266 = por %p264, %p265
      %p267 = scmp.ne.s32.totalorder %s256, %s257
      %p268 = scmp.eq.s32.totalorder %s28, 0
      %p269 = por %p267, %p268
      %p270 = scmp.ne.s32.totalorder %s256, %s257
      %p271 = scmp.eq.s32.totalorder %s29, 1
      %p272 = por %p270, %p271
      %p274 = scmp.ne.s32.totalorder %s257, %s273
      %p275 = scmp.eq.s32.totalorder %s29, 0
      %p276 = por %p274, %p275
      %s277 = ssub.s32 %s30, %s42
      %s278 = ssub.s32 %s31, %s38
      %s279 = sor.u32 %s277, %s278
      %p280 = scmp.eq.s32.totalorder %s279, 0
      %s282 = sadd.s32 %s281, 1
      %s283 = scalar_select %p280, %s281, %s282
      %p286 = pneg %p280
      %p287 = scmp.eq.s32.totalorder %s23, 1
      %p288 = por %p286, %p287
      %p289 = scmp.ne.s32.totalorder %s281, %s284
      %p290 = scmp.eq.s32.totalorder %s23, 0
      %p291 = por %p289, %p290
      %p292 = scmp.ne.s32.totalorder %s281, %s284
      %p293 = scmp.eq.s32.totalorder %s28, 1
      %p294 = por %p292, %p293
      %p295 = scmp.ne.s32.totalorder %s284, %s285
      %p296 = scmp.eq.s32.totalorder %s28, 0
      %p297 = por %p295, %p296
      %p298 = scmp.ne.s32.totalorder %s284, %s285
      %p299 = scmp.eq.s32.totalorder %s29, 1
      %p300 = por %p298, %p299
      %p302 = scmp.ne.s32.totalorder %s285, %s301
      %p303 = scmp.eq.s32.totalorder %s29, 0
      %p304 = por %p302, %p303
      %p305 = scmp.le.s32.totalorder 1, %s23
      %p306 = scmp.lt.s32.totalorder %s23, 3
      %p307 = pnand %p305, %p306
      %p308 = pneg %p307
      // Predicated region
      $region9: #{tpu_custom_call.1} parent=5 // pred_check
        _
      $region10: #{tpu_custom_call.1} parent=5 // pred_check_branch
        %310 = sbr.rel (%p307) target = $region12
      $region11: #{tpu_custom_call.1} parent=5 // pred_region
        %s311 = ssub.s32 %s23, 1
        // Predicated region
        $region13: #{tpu_custom_call.1} parent=11 // pred_check
          %p312 = pneg %p136
        $region14: #{tpu_custom_call.1} parent=11 // pred_check_branch
          %314 = sbr.rel (%p312) target = $region16
        $region15: #{tpu_custom_call.1} parent=11 // pred_region
          _
        $region16: #{tpu_custom_call.1} parent=11 // pred_fallthru
          _
        // Predicated region
        $region17: #{tpu_custom_call.1} parent=11 // pred_check
          %p315 = pneg %p157
        $region18: #{tpu_custom_call.1} parent=11 // pred_check_branch
          %317 = sbr.rel (%p315) target = $region20
        $region19: #{tpu_custom_call.1} parent=11 // pred_region
          _
        $region20: #{tpu_custom_call.1} parent=11 // pred_fallthru
          _
        // Predicated region
        $region21: #{tpu_custom_call.1} parent=11 // pred_check
          %p318 = pneg %p178
        $region22: #{tpu_custom_call.1} parent=11 // pred_check_branch
          %320 = sbr.rel (%p318) target = $region24
        $region23: #{tpu_custom_call.1} parent=11 // pred_region
          _
        $region24: #{tpu_custom_call.1} parent=11 // pred_fallthru
          _
        // Predicated region
        $region25: #{tpu_custom_call.1} parent=11 // pred_check
          %p321 = pneg %p199
        $region26: #{tpu_custom_call.1} parent=11 // pred_check_branch
          %323 = sbr.rel (%p321) target = $region28
        $region27: #{tpu_custom_call.1} parent=11 // pred_region
          _
        $region28: #{tpu_custom_call.1} parent=11 // pred_fallthru
          _
        // Predicated region
        $region29: #{tpu_custom_call.1} parent=11 // pred_check
          %p324 = pneg %p220
        $region30: #{tpu_custom_call.1} parent=11 // pred_check_branch
          %326 = sbr.rel (%p324) target = $region32
        $region31: #{tpu_custom_call.1} parent=11 // pred_region
          _
        $region32: #{tpu_custom_call.1} parent=11 // pred_fallthru
          _
        // Predicated region
        $region33: #{tpu_custom_call.1} parent=11 // pred_check
          %p327 = pneg %p241
        $region34: #{tpu_custom_call.1} parent=11 // pred_check_branch
          %329 = sbr.rel (%p327) target = $region36
        $region35: #{tpu_custom_call.1} parent=11 // pred_region
          _
        $region36: #{tpu_custom_call.1} parent=11 // pred_fallthru
          _
      $region12: #{tpu_custom_call.1} parent=5 // pred_fallthru
        _
      %p330 = scmp.lt.s32.totalorder %s23, 2
      // Predicated region
      $region37: #{tpu_custom_call.1} parent=5 // pred_check
        %p331 = pneg %p330
      $region38: #{tpu_custom_call.1} parent=5 // pred_check_branch
        %333 = sbr.rel (%p331) target = $region40
      $region39: #{tpu_custom_call.1} parent=5 // pred_region
        // Predicated region
        $region41: #{tpu_custom_call.1} parent=39 // pred_check
          %p334 = pneg %p57
        $region42: #{tpu_custom_call.1} parent=39 // pred_check_branch
          %336 = sbr.rel (%p334) target = $region44
        $region43: #{tpu_custom_call.1} parent=39 // pred_region
          %p337 = scmp.lt.s32.totalorder %s30, 1
          %s338 = scalar_select %p337, %s30, 1
          %p339 = scmp.lt.s32.totalorder %s31, 0
          %s340 = scalar_select %p339, %s31, 0
          %s341 = sadd.s32 %s340, %s338
          %s342 = smul.addr %s341, 8
          %s343 = scalar_lea.vmem %s0, %s342
        $region44: #{tpu_custom_call.1} parent=39 // pred_fallthru
          _
        // Predicated region
        $region45: #{tpu_custom_call.1} parent=39 // pred_check
          %p344 = pneg %p83
        $region46: #{tpu_custom_call.1} parent=39 // pred_check_branch
          %346 = sbr.rel (%p344) target = $region48
        $region47: #{tpu_custom_call.1} parent=39 // pred_region
          %p347 = scmp.lt.s32.totalorder %s30, 1
          %s348 = scalar_select %p347, %s30, 1
          %s349 = smul.addr %s348, 8
          %s350 = scalar_lea.vmem %s1, %s349
        $region48: #{tpu_custom_call.1} parent=39 // pred_fallthru
          _
        // Predicated region
        $region49: #{tpu_custom_call.1} parent=39 // pred_check
          %p351 = pneg %p109
        $region50: #{tpu_custom_call.1} parent=39 // pred_check_branch
          %353 = sbr.rel (%p351) target = $region52
        $region51: #{tpu_custom_call.1} parent=39 // pred_region
          %p354 = scmp.lt.s32.totalorder %s30, 1
          %s355 = scalar_select %p354, %s30, 1
          %s356 = smul.addr %s355, 8
          %s357 = scalar_lea.vmem %s2, %s356
        $region52: #{tpu_custom_call.1} parent=39 // pred_fallthru
          _
      $region40: #{tpu_custom_call.1} parent=5 // pred_fallthru
        _
      %p358 = scmp.le.s32.totalorder 1, %s23
      %p359 = scmp.lt.s32.totalorder %s23, 3
      %p360 = pnand %p358, %p359
      %p361 = pneg %p360
      // Predicated region
      $region53: #{tpu_custom_call.1} parent=5 // pred_check
        _
      $region54: #{tpu_custom_call.1} parent=5 // pred_check_branch
        %363 = sbr.rel (%p360) target = $region56
      $region55: #{tpu_custom_call.1} parent=5 // pred_region
        %s364 = ssub.s32 %s23, 1
        %p365 = scmp.lt.s32.totalorder %s32, 1
        %s366 = scalar_select %p365, %s32, 1
        %p367 = scmp.lt.s32.totalorder %s33, 0
        %s368 = scalar_select %p367, %s33, 0
        %s369 = sadd.s32 %s368, %s366
        %s370 = smul.addr %s369, 8
        %s371 = scalar_lea.vmem %s0, %s370
        %p372 = pneg %p63
        %p373 = pneg %p60
        %p374 = scmp.lt.s32.totalorder %s32, 1
        %s375 = scalar_select %p374, %s32, 1
        %s376 = smul.addr %s375, 8
        %s377 = scalar_lea.vmem %s1, %s376
        %p378 = pneg %p89
        %p379 = pneg %p86
        %p380 = scmp.lt.s32.totalorder %s32, 1
        %s381 = scalar_select %p380, %s32, 1
        %s382 = smul.addr %s381, 8
        %s383 = scalar_lea.vmem %s2, %s382
        %p384 = pneg %p115
        %p385 = pneg %p112
        %p386 = pneg %p136
        %p387 = pneg %p133
        %p388 = pneg %p157
        %p389 = pneg %p154
        %p390 = pneg %p178
        %p391 = pneg %p175
        %p392 = pneg %p199
        %p393 = pneg %p196
        %p394 = pneg %p220
        %p395 = pneg %p217
        %p396 = pneg %p241
        %p397 = pneg %p238
        %p398 = pneg %p269
        %p399 = pneg %p266
        %s400 = sand.u32 %s256, 1
        %s401 = scalar_lea.sflag [#allocation6], %s400
        %s402 = sand.u32 %s256, 1
        %s403 = smul.addr %s402, 8
        %s404 = scalar_lea.vmem [#allocation5], %s403
        %p405 = pneg %p297
        %p406 = pneg %p294
        %s407 = sand.u32 %s284, 1
        %s408 = scalar_lea.sflag [#allocation8], %s407
        %s409 = sand.u32 %s284, 1
        %s410 = smul.addr %s409, 32
        %s411 = scalar_lea.vmem [#allocation7], %s410
        %p412 = scmp.lt.s32.totalorder %s32, 1
        %s413 = scalar_select %p412, %s32, 1
        %p414 = scmp.lt.s32.totalorder %s33, 0
        %s415 = scalar_select %p414, %s33, 0
        %s416 = sadd.s32 %s415, %s413
        %s417 = smul.addr %s416, 8
        %s418 = scalar_lea.vmem %s0, %s417
        %p419 = scmp.lt.s32.totalorder %s32, 1
        %s420 = scalar_select %p419, %s32, 1
        %s421 = smul.addr %s420, 8
        %s422 = scalar_lea.vmem %s1, %s421
        %p423 = scmp.lt.s32.totalorder %s32, 1
        %s424 = scalar_select %p423, %s32, 1
        %s425 = smul.addr %s424, 8
        %s426 = scalar_lea.vmem %s2, %s425
        %v428 = vld [vmem:[%s418] sm:$0xff]
        %v429 = vld [vmem:[%s422] sm:$0xff]
        %v430 = vld [vmem:[%s426] sm:$0xff]
        %v431 = vpack.c.bf16 %v428, %v428
        %v432 = vpack.c.bf16 %v429, %v429
        %v433 = vpack.c.bf16 %v430, %v430
        %v434 = vld [vmem:[%s3] sm:$0xf]
        %v435 = vld [vmem:[%s3 + $0x4] sm:$0xf]
        %v436 = vld [vmem:[%s3 + $0x8] sm:$0xf]
        %v437 = vld [vmem:[%s3 + $0xc] sm:$0xf]
        %v442 = vunpack.c.l.b16 %v434
        %v443 = vunpack.c.l.b16 %v435
        %v444 = vunpack.c.l.b16 %v436
        %v445 = vunpack.c.l.b16 %v437
        %v446 = vpack.c.b16 %v443, %v442
        %v447 = vpack.c.b16 %v445, %v444
        %vm450 = vcmask 261120
        %v452 = vsel %vm450, %v431, 0
        %454 = vmatprep.subr.bf16.mxu0 0
        %455 = vmatpush1.bf16.msra.mxu0 %v446
        %456 = vmatprep.subr.bf16.mxu0 0
        %457 = vmatpush1.bf16.msra.mxu0 %v447
        %458 = vmatprep.subr.bf16.mxu0 0
        %459 = vmatpush1.bf16.msra.mxu0 0
        %460 = vmatprep.subr.bf16.mxu0 0
        %461 = vmatpush1.bf16.msra.mxu0 0
        %462 = vmatprep.subr.bf16.mxu0 0
        %463 = vmatpush1.bf16.msra.mxu0 0
        %464 = vmatprep.subr.bf16.mxu0 0
        %465 = vmatpush1.bf16.msra.mxu0 0
        %466 = vmatprep.subr.bf16.mxu0 0
        %467 = vmatpush1.bf16.msra.mxu0 0
        %468 = vmatprep.subr.bf16.mxu0 0
        %469 = vmatpush1.bf16.msra.mxu0 0
        %470 = vmatprep.subr.bf16.mxu0 0
        %471 = vmatpush1.bf16.msra.mxu0 0
        %472 = vmatprep.subr.bf16.mxu0 0
        %473 = vmatpush1.bf16.msra.mxu0 0
        %474 = vmatprep.subr.bf16.mxu0 0
        %475 = vmatpush1.bf16.msra.mxu0 0
        %476 = vmatprep.subr.bf16.mxu0 0
        %477 = vmatpush1.bf16.msra.mxu0 0
        %478 = vmatprep.subr.bf16.mxu0 0
        %479 = vmatpush1.bf16.msra.mxu0 0
        %480 = vmatprep.subr.bf16.mxu0 0
        %481 = vmatpush1.bf16.msra.mxu0 0
        %482 = vmatprep.subr.bf16.mxu0 0
        %483 = vmatpush1.bf16.msra.mxu0 0
        %484 = vmatprep.subr.bf16.mxu0 0
        %485 = vmatpush1.bf16.msra.mxu0 0
        %486 = vmatprep.mubr.bf16.mxu0 0
        %487 = vmatmul.mubr.bf16.gmra.mrb[0].mxu0 %v452
        %v488 = vpop.f32.mrb[0].mxu0
        %v489 = vadd.f32 0.0, %v488
        %v490 = vpop.f32.mrb[0].mxu0
        %v491 = vpop.f32.mrb[0].mxu0
        %v492 = vpop.f32.mrb[0].mxu0
        %493 = vdwg.mxu0
        %v494 = vmul.f32 %v489, 0.35355338
        %v495 = vpack.c.bf16 %v494, %v494
        %vm496 = vcmask 60416
        %497 = vst.msk [vmem:[#allocation2] sm:$0xf] %vm496, %v495
        %v498 = vld [vmem:[%s4] sm:$0xf]
        %v499 = vld [vmem:[%s4 + $0x4] sm:$0xf]
        %v500 = vld [vmem:[%s4 + $0x8] sm:$0xf]
        %v501 = vld [vmem:[%s4 + $0xc] sm:$0xf]
        %v506 = vunpack.c.l.b16 %v498
        %v507 = vunpack.c.l.b16 %v499
        %v508 = vunpack.c.l.b16 %v500
        %v509 = vunpack.c.l.b16 %v501
        %v510 = vpack.c.b16 %v507, %v506
        %v511 = vpack.c.b16 %v509, %v508
        %v515 = vsel %vm450, %v432, 0
        %517 = vmatprep.subr.bf16.mxu0 0
        %518 = vmatpush1.bf16.msra.mxu0 %v510
        %519 = vmatprep.subr.bf16.mxu0 0
        %520 = vmatpush1.bf16.msra.mxu0 %v511
        %521 = vmatprep.subr.bf16.mxu0 0
        %522 = vmatpush1.bf16.msra.mxu0 0
        %523 = vmatprep.subr.bf16.mxu0 0
        %524 = vmatpush1.bf16.msra.mxu0 0
        %525 = vmatprep.subr.bf16.mxu0 0
        %526 = vmatpush1.bf16.msra.mxu0 0
        %527 = vmatprep.subr.bf16.mxu0 0
        %528 = vmatpush1.bf16.msra.mxu0 0
        %529 = vmatprep.subr.bf16.mxu0 0
        %530 = vmatpush1.bf16.msra.mxu0 0
        %531 = vmatprep.subr.bf16.mxu0 0
        %532 = vmatpush1.bf16.msra.mxu0 0
        %533 = vmatprep.subr.bf16.mxu0 0
        %534 = vmatpush1.bf16.msra.mxu0 0
        %535 = vmatprep.subr.bf16.mxu0 0
        %536 = vmatpush1.bf16.msra.mxu0 0
        %537 = vmatprep.subr.bf16.mxu0 0
        %538 = vmatpush1.bf16.msra.mxu0 0
        %539 = vmatprep.subr.bf16.mxu0 0
        %540 = vmatpush1.bf16.msra.mxu0 0
        %541 = vmatprep.subr.bf16.mxu0 0
        %542 = vmatpush1.bf16.msra.mxu0 0
        %543 = vmatprep.subr.bf16.mxu0 0
        %544 = vmatpush1.bf16.msra.mxu0 0
        %545 = vmatprep.subr.bf16.mxu0 0
        %546 = vmatpush1.bf16.msra.mxu0 0
        %547 = vmatprep.subr.bf16.mxu0 0
        %548 = vmatpush1.bf16.msra.mxu0 0
        %549 = vmatprep.mubr.bf16.mxu0 0
        %550 = vmatmul.mubr.bf16.gmra.mrb[0].mxu0 %v515
        %v551 = vpop.f32.mrb[0].mxu0
        %v552 = vadd.f32 0.0, %v551
        %v553 = vpop.f32.mrb[0].mxu0
        %v554 = vpop.f32.mrb[0].mxu0
        %v555 = vpop.f32.mrb[0].mxu0
        %556 = vdwg.mxu0
        %v557 = vpack.c.bf16 %v552, %v552
        %558 = vst.msk [vmem:[#allocation3] sm:$0xf] %vm496, %v557
        %v559 = vld [vmem:[%s5] sm:$0xf]
        %v560 = vld [vmem:[%s5 + $0x4] sm:$0xf]
        %v561 = vld [vmem:[%s5 + $0x8] sm:$0xf]
        %v562 = vld [vmem:[%s5 + $0xc] sm:$0xf]
        %v567 = vunpack.c.l.b16 %v559
        %v568 = vunpack.c.l.b16 %v560
        %v569 = vunpack.c.l.b16 %v561
        %v570 = vunpack.c.l.b16 %v562
        %v571 = vpack.c.b16 %v568, %v567
        %v572 = vpack.c.b16 %v570, %v569
        %v576 = vsel %vm450, %v433, 0
        %578 = vmatprep.subr.bf16.mxu0 0
        %579 = vmatpush1.bf16.msra.mxu0 %v571
        %580 = vmatprep.subr.bf16.mxu0 0
        %581 = vmatpush1.bf16.msra.mxu0 %v572
        %582 = vmatprep.subr.bf16.mxu0 0
        %583 = vmatpush1.bf16.msra.mxu0 0
        %584 = vmatprep.subr.bf16.mxu0 0
        %585 = vmatpush1.bf16.msra.mxu0 0
        %586 = vmatprep.subr.bf16.mxu0 0
        %587 = vmatpush1.bf16.msra.mxu0 0
        %588 = vmatprep.subr.bf16.mxu0 0
        %589 = vmatpush1.bf16.msra.mxu0 0
        %590 = vmatprep.subr.bf16.mxu0 0
        %591 = vmatpush1.bf16.msra.mxu0 0
        %592 = vmatprep.subr.bf16.mxu0 0
        %593 = vmatpush1.bf16.msra.mxu0 0
        %594 = vmatprep.subr.bf16.mxu0 0
        %595 = vmatpush1.bf16.msra.mxu0 0
        %596 = vmatprep.subr.bf16.mxu0 0
        %597 = vmatpush1.bf16.msra.mxu0 0
        %598 = vmatprep.subr.bf16.mxu0 0
        %599 = vmatpush1.bf16.msra.mxu0 0
        %600 = vmatprep.subr.bf16.mxu0 0
        %601 = vmatpush1.bf16.msra.mxu0 0
        %602 = vmatprep.subr.bf16.mxu0 0
        %603 = vmatpush1.bf16.msra.mxu0 0
        %604 = vmatprep.subr.bf16.mxu0 0
        %605 = vmatpush1.bf16.msra.mxu0 0
        %606 = vmatprep.subr.bf16.mxu0 0
        %607 = vmatpush1.bf16.msra.mxu0 0
        %608 = vmatprep.subr.bf16.mxu0 0
        %609 = vmatpush1.bf16.msra.mxu0 0
        %610 = vmatprep.mubr.bf16.mxu0 0
        %611 = vmatmul.mubr.bf16.gmra.mrb[0].mxu0 %v576
        %v612 = vpop.f32.mrb[0].mxu0
        %v613 = vadd.f32 0.0, %v612
        %v614 = vpop.f32.mrb[0].mxu0
        %v615 = vpop.f32.mrb[0].mxu0
        %v616 = vpop.f32.mrb[0].mxu0
        %617 = vdwg.mxu0
        %v618 = vpack.c.bf16 %v613, %v613
        %619 = vst.msk [vmem:[#allocation4] sm:$0xf] %vm496, %v618
        %s620 = scalar_lea.vmem %s3, 16
        %v621 = vld [vmem:[%s620] sm:$0xf]
        %v622 = vld [vmem:[%s620 + $0x4] sm:$0xf]
        %v623 = vld [vmem:[%s620 + $0x8] sm:$0xf]
        %v624 = vld [vmem:[%s620 + $0xc] sm:$0xf]
        %v629 = vunpack.c.l.b16 %v621
        %v630 = vunpack.c.l.b16 %v622
        %v631 = vunpack.c.l.b16 %v623
        %v632 = vunpack.c.l.b16 %v624
        %v633 = vpack.c.b16 %v630, %v629
        %v634 = vpack.c.b16 %v632, %v631
        %637 = vmatprep.subr.bf16.mxu0 0
        %638 = vmatpush1.bf16.msra.mxu0 %v633
        %639 = vmatprep.subr.bf16.mxu0 0
        %640 = vmatpush1.bf16.msra.mxu0 %v634
        %641 = vmatprep.subr.bf16.mxu0 0
        %642 = vmatpush1.bf16.msra.mxu0 0
        %643 = vmatprep.subr.bf16.mxu0 0
        %644 = vmatpush1.bf16.msra.mxu0 0
        %645 = vmatprep.subr.bf16.mxu0 0
        %646 = vmatpush1.bf16.msra.mxu0 0
        %647 = vmatprep.subr.bf16.mxu0 0
        %648 = vmatpush1.bf16.msra.mxu0 0
        %649 = vmatprep.subr.bf16.mxu0 0
        %650 = vmatpush1.bf16.msra.mxu0 0
        %651 = vmatprep.subr.bf16.mxu0 0
        %652 = vmatpush1.bf16.msra.mxu0 0
        %653 = vmatprep.subr.bf16.mxu0 0
        %654 = vmatpush1.bf16.msra.mxu0 0
        %655 = vmatprep.subr.bf16.mxu0 0
        %656 = vmatpush1.bf16.msra.mxu0 0
        %657 = vmatprep.subr.bf16.mxu0 0
        %658 = vmatpush1.bf16.msra.mxu0 0
        %659 = vmatprep.subr.bf16.mxu0 0
        %660 = vmatpush1.bf16.msra.mxu0 0
        %661 = vmatprep.subr.bf16.mxu0 0
        %662 = vmatpush1.bf16.msra.mxu0 0
        %663 = vmatprep.subr.bf16.mxu0 0
        %664 = vmatpush1.bf16.msra.mxu0 0
        %665 = vmatprep.subr.bf16.mxu0 0
        %666 = vmatpush1.bf16.msra.mxu0 0
        %667 = vmatprep.subr.bf16.mxu0 0
        %668 = vmatpush1.bf16.msra.mxu0 0
        %669 = vmatprep.mubr.bf16.mxu0 0
        %670 = vmatmul.mubr.bf16.gmra.mrb[0].mxu0 %v452
        %v671 = vpop.f32.mrb[0].mxu0
        %v672 = vadd.f32 0.0, %v671
        %v673 = vpop.f32.mrb[0].mxu0
        %v674 = vpop.f32.mrb[0].mxu0
        %v675 = vpop.f32.mrb[0].mxu0
        %676 = vdwg.mxu0
        %v677 = vmul.f32 %v672, 0.35355338
        %v678 = vpack.c.bf16 %v677, %v677
        %s679 = scalar_lea.vmem [#allocation2], 4
        %680 = vst.msk [vmem:[%s679] sm:$0xf] %vm496, %v678
        %s681 = scalar_lea.vmem %s4, 16
        %v682 = vld [vmem:[%s681] sm:$0xf]
        %v683 = vld [vmem:[%s681 + $0x4] sm:$0xf]
        %v684 = vld [vmem:[%s681 + $0x8] sm:$0xf]
        %v685 = vld [vmem:[%s681 + $0xc] sm:$0xf]
        %v690 = vunpack.c.l.b16 %v682
        %v691 = vunpack.c.l.b16 %v683
        %v692 = vunpack.c.l.b16 %v684
        %v693 = vunpack.c.l.b16 %v685
        %v694 = vpack.c.b16 %v691, %v690
        %v695 = vpack.c.b16 %v693, %v692
        %698 = vmatprep.subr.bf16.mxu0 0
        %699 = vmatpush1.bf16.msra.mxu0 %v694
        %700 = vmatprep.subr.bf16.mxu0 0
        %701 = vmatpush1.bf16.msra.mxu0 %v695
        %702 = vmatprep.subr.bf16.mxu0 0
        %703 = vmatpush1.bf16.msra.mxu0 0
        %704 = vmatprep.subr.bf16.mxu0 0
        %705 = vmatpush1.bf16.msra.mxu0 0
        %706 = vmatprep.subr.bf16.mxu0 0
        %707 = vmatpush1.bf16.msra.mxu0 0
        %708 = vmatprep.subr.bf16.mxu0 0
        %709 = vmatpush1.bf16.msra.mxu0 0
        %710 = vmatprep.subr.bf16.mxu0 0
        %711 = vmatpush1.bf16.msra.mxu0 0
        %712 = vmatprep.subr.bf16.mxu0 0
        %713 = vmatpush1.bf16.msra.mxu0 0
        %714 = vmatprep.subr.bf16.mxu0 0
        %715 = vmatpush1.bf16.msra.mxu0 0
        %716 = vmatprep.subr.bf16.mxu0 0
        %717 = vmatpush1.bf16.msra.mxu0 0
        %718 = vmatprep.subr.bf16.mxu0 0
        %719 = vmatpush1.bf16.msra.mxu0 0
        %720 = vmatprep.subr.bf16.mxu0 0
        %721 = vmatpush1.bf16.msra.mxu0 0
        %722 = vmatprep.subr.bf16.mxu0 0
        %723 = vmatpush1.bf16.msra.mxu0 0
        %724 = vmatprep.subr.bf16.mxu0 0
        %725 = vmatpush1.bf16.msra.mxu0 0
        %726 = vmatprep.subr.bf16.mxu0 0
        %727 = vmatpush1.bf16.msra.mxu0 0
        %728 = vmatprep.subr.bf16.mxu0 0
        %729 = vmatpush1.bf16.msra.mxu0 0
        %730 = vmatprep.mubr.bf16.mxu0 0
        %731 = vmatmul.mubr.bf16.gmra.mrb[0].mxu0 %v515
        %v732 = vpop.f32.mrb[0].mxu0
        %v733 = vadd.f32 0.0, %v732
        %v734 = vpop.f32.mrb[0].mxu0
        %v735 = vpop.f32.mrb[0].mxu0
        %v736 = vpop.f32.mrb[0].mxu0
        %737 = vdwg.mxu0
        %v738 = vpack.c.bf16 %v733, %v733
        %s739 = scalar_lea.vmem [#allocation3], 4
        %740 = vst.msk [vmem:[%s739] sm:$0xf] %vm496, %v738
        %s741 = scalar_lea.vmem %s5, 16
        %v742 = vld [vmem:[%s741] sm:$0xf]
        %v743 = vld [vmem:[%s741 + $0x4] sm:$0xf]
        %v744 = vld [vmem:[%s741 + $0x8] sm:$0xf]
        %v745 = vld [vmem:[%s741 + $0xc] sm:$0xf]
        %v750 = vunpack.c.l.b16 %v742
        %v751 = vunpack.c.l.b16 %v743
        %v752 = vunpack.c.l.b16 %v744
        %v753 = vunpack.c.l.b16 %v745
        %v754 = vpack.c.b16 %v751, %v750
        %v755 = vpack.c.b16 %v753, %v752
        %758 = vmatprep.subr.bf16.mxu0 0
        %759 = vmatpush1.bf16.msra.mxu0 %v754
        %760 = vmatprep.subr.bf16.mxu0 0
        %761 = vmatpush1.bf16.msra.mxu0 %v755
        %762 = vmatprep.subr.bf16.mxu0 0
        %763 = vmatpush1.bf16.msra.mxu0 0
        %764 = vmatprep.subr.bf16.mxu0 0
        %765 = vmatpush1.bf16.msra.mxu0 0
        %766 = vmatprep.subr.bf16.mxu0 0
        %767 = vmatpush1.bf16.msra.mxu0 0
        %768 = vmatprep.subr.bf16.mxu0 0
        %769 = vmatpush1.bf16.msra.mxu0 0
        %770 = vmatprep.subr.bf16.mxu0 0
        %771 = vmatpush1.bf16.msra.mxu0 0
        %772 = vmatprep.subr.bf16.mxu0 0
        %773 = vmatpush1.bf16.msra.mxu0 0
        %774 = vmatprep.subr.bf16.mxu0 0
        %775 = vmatpush1.bf16.msra.mxu0 0
        %776 = vmatprep.subr.bf16.mxu0 0
        %777 = vmatpush1.bf16.msra.mxu0 0
        %778 = vmatprep.subr.bf16.mxu0 0
        %779 = vmatpush1.bf16.msra.mxu0 0
        %780 = vmatprep.subr.bf16.mxu0 0
        %781 = vmatpush1.bf16.msra.mxu0 0
        %782 = vmatprep.subr.bf16.mxu0 0
        %783 = vmatpush1.bf16.msra.mxu0 0
        %784 = vmatprep.subr.bf16.mxu0 0
        %785 = vmatpush1.bf16.msra.mxu0 0
        %786 = vmatprep.subr.bf16.mxu0 0
        %787 = vmatpush1.bf16.msra.mxu0 0
        %788 = vmatprep.subr.bf16.mxu0 0
        %789 = vmatpush1.bf16.msra.mxu0 0
        %790 = vmatprep.mubr.bf16.mxu0 0
        %791 = vmatmul.mubr.bf16.gmra.mrb[0].mxu0 %v576
        %v792 = vpop.f32.mrb[0].mxu0
        %v793 = vadd.f32 0.0, %v792
        %v794 = vpop.f32.mrb[0].mxu0
        %v795 = vpop.f32.mrb[0].mxu0
        %v796 = vpop.f32.mrb[0].mxu0
        %797 = vdwg.mxu0
        %v798 = vpack.c.bf16 %v793, %v793
        %s799 = scalar_lea.vmem [#allocation4], 4
        %800 = vst.msk [vmem:[%s799] sm:$0xf] %vm496, %v798
        %s801 = scalar_lea.vmem %s3, 32
        %v802 = vld [vmem:[%s801] sm:$0xf]
        %v803 = vld [vmem:[%s801 + $0x4] sm:$0xf]
        %v804 = vld [vmem:[%s801 + $0x8] sm:$0xf]
        %v805 = vld [vmem:[%s801 + $0xc] sm:$0xf]
        %v810 = vunpack.c.l.b16 %v802
        %v811 = vunpack.c.l.b16 %v803
        %v812 = vunpack.c.l.b16 %v804
        %v813 = vunpack.c.l.b16 %v805
        %v814 = vpack.c.b16 %v811, %v810
        %v815 = vpack.c.b16 %v813, %v812
        %818 = vmatprep.subr.bf16.mxu0 0
        %819 = vmatpush1.bf16.msra.mxu0 %v814
        %820 = vmatprep.subr.bf16.mxu0 0
        %821 = vmatpush1.bf16.msra.mxu0 %v815
        %822 = vmatprep.subr.bf16.mxu0 0
        %823 = vmatpush1.bf16.msra.mxu0 0
        %824 = vmatprep.subr.bf16.mxu0 0
        %825 = vmatpush1.bf16.msra.mxu0 0
        %826 = vmatprep.subr.bf16.mxu0 0
        %827 = vmatpush1.bf16.msra.mxu0 0
        %828 = vmatprep.subr.bf16.mxu0 0
        %829 = vmatpush1.bf16.msra.mxu0 0
        %830 = vmatprep.subr.bf16.mxu0 0
        %831 = vmatpush1.bf16.msra.mxu0 0
        %832 = vmatprep.subr.bf16.mxu0 0
        %833 = vmatpush1.bf16.msra.mxu0 0
        %834 = vmatprep.subr.bf16.mxu0 0
        %835 = vmatpush1.bf16.msra.mxu0 0
        %836 = vmatprep.subr.bf16.mxu0 0
        %837 = vmatpush1.bf16.msra.mxu0 0
        %838 = vmatprep.subr.bf16.mxu0 0
        %839 = vmatpush1.bf16.msra.mxu0 0
        %840 = vmatprep.subr.bf16.mxu0 0
        %841 = vmatpush1.bf16.msra.mxu0 0
        %842 = vmatprep.subr.bf16.mxu0 0
        %843 = vmatpush1.bf16.msra.mxu0 0
        %844 = vmatprep.subr.bf16.mxu0 0
        %845 = vmatpush1.bf16.msra.mxu0 0
        %846 = vmatprep.subr.bf16.mxu0 0
        %847 = vmatpush1.bf16.msra.mxu0 0
        %848 = vmatprep.subr.bf16.mxu0 0
        %849 = vmatpush1.bf16.msra.mxu0 0
        %850 = vmatprep.mubr.bf16.mxu0 0
        %851 = vmatmul.mubr.bf16.gmra.mrb[0].mxu0 %v452
        %v852 = vpop.f32.mrb[0].mxu0
        %v853 = vadd.f32 0.0, %v852
        %v854 = vpop.f32.mrb[0].mxu0
        %v855 = vpop.f32.mrb[0].mxu0
        %v856 = vpop.f32.mrb[0].mxu0
        %857 = vdwg.mxu0
        %v858 = vmul.f32 %v853, 0.35355338
        %v859 = vpack.c.bf16 %v858, %v858
        %s860 = scalar_lea.vmem [#allocation2], 8
        %861 = vst.msk [vmem:[%s860] sm:$0xf] %vm496, %v859
        %s862 = scalar_lea.vmem %s4, 32
        %v863 = vld [vmem:[%s862] sm:$0xf]
        %v864 = vld [vmem:[%s862 + $0x4] sm:$0xf]
        %v865 = vld [vmem:[%s862 + $0x8] sm:$0xf]
        %v866 = vld [vmem:[%s862 + $0xc] sm:$0xf]
        %v871 = vunpack.c.l.b16 %v863
        %v872 = vunpack.c.l.b16 %v864
        %v873 = vunpack.c.l.b16 %v865
        %v874 = vunpack.c.l.b16 %v866
        %v875 = vpack.c.b16 %v872, %v871
        %v876 = vpack.c.b16 %v874, %v873
        %879 = vmatprep.subr.bf16.mxu0 0
        %880 = vmatpush1.bf16.msra.mxu0 %v875
        %881 = vmatprep.subr.bf16.mxu0 0
        %882 = vmatpush1.bf16.msra.mxu0 %v876
        %883 = vmatprep.subr.bf16.mxu0 0
        %884 = vmatpush1.bf16.msra.mxu0 0
        %885 = vmatprep.subr.bf16.mxu0 0
        %886 = vmatpush1.bf16.msra.mxu0 0
        %887 = vmatprep.subr.bf16.mxu0 0
        %888 = vmatpush1.bf16.msra.mxu0 0
        %889 = vmatprep.subr.bf16.mxu0 0
        %890 = vmatpush1.bf16.msra.mxu0 0
        %891 = vmatprep.subr.bf16.mxu0 0
        %892 = vmatpush1.bf16.msra.mxu0 0
        %893 = vmatprep.subr.bf16.mxu0 0
        %894 = vmatpush1.bf16.msra.mxu0 0
        %895 = vmatprep.subr.bf16.mxu0 0
        %896 = vmatpush1.bf16.msra.mxu0 0
        %897 = vmatprep.subr.bf16.mxu0 0
        %898 = vmatpush1.bf16.msra.mxu0 0
        %899 = vmatprep.subr.bf16.mxu0 0
        %900 = vmatpush1.bf16.msra.mxu0 0
        %901 = vmatprep.subr.bf16.mxu0 0
        %902 = vmatpush1.bf16.msra.mxu0 0
        %903 = vmatprep.subr.bf16.mxu0 0
        %904 = vmatpush1.bf16.msra.mxu0 0
        %905 = vmatprep.subr.bf16.mxu0 0
        %906 = vmatpush1.bf16.msra.mxu0 0
        %907 = vmatprep.subr.bf16.mxu0 0
        %908 = vmatpush1.bf16.msra.mxu0 0
        %909 = vmatprep.subr.bf16.mxu0 0
        %910 = vmatpush1.bf16.msra.mxu0 0
        %911 = vmatprep.mubr.bf16.mxu0 0
        %912 = vmatmul.mubr.bf16.gmra.mrb[0].mxu0 %v515
        %v913 = vpop.f32.mrb[0].mxu0
        %v914 = vadd.f32 0.0, %v913
        %v915 = vpop.f32.mrb[0].mxu0
        %v916 = vpop.f32.mrb[0].mxu0
        %v917 = vpop.f32.mrb[0].mxu0
        %918 = vdwg.mxu0
        %v919 = vpack.c.bf16 %v914, %v914
        %s920 = scalar_lea.vmem [#allocation3], 8
        %921 = vst.msk [vmem:[%s920] sm:$0xf] %vm496, %v919
        %s922 = scalar_lea.vmem %s5, 32
        %v923 = vld [vmem:[%s922] sm:$0xf]
        %v924 = vld [vmem:[%s922 + $0x4] sm:$0xf]
        %v925 = vld [vmem:[%s922 + $0x8] sm:$0xf]
        %v926 = vld [vmem:[%s922 + $0xc] sm:$0xf]
        %v931 = vunpack.c.l.b16 %v923
        %v932 = vunpack.c.l.b16 %v924
        %v933 = vunpack.c.l.b16 %v925
        %v934 = vunpack.c.l.b16 %v926
        %v935 = vpack.c.b16 %v932, %v931
        %v936 = vpack.c.b16 %v934, %v933
        %939 = vmatprep.subr.bf16.mxu0 0
        %940 = vmatpush1.bf16.msra.mxu0 %v935
        %941 = vmatprep.subr.bf16.mxu0 0
        %942 = vmatpush1.bf16.msra.mxu0 %v936
        %943 = vmatprep.subr.bf16.mxu0 0
        %944 = vmatpush1.bf16.msra.mxu0 0
        %945 = vmatprep.subr.bf16.mxu0 0
        %946 = vmatpush1.bf16.msra.mxu0 0
        %947 = vmatprep.subr.bf16.mxu0 0
        %948 = vmatpush1.bf16.msra.mxu0 0
        %949 = vmatprep.subr.bf16.mxu0 0
        %950 = vmatpush1.bf16.msra.mxu0 0
        %951 = vmatprep.subr.bf16.mxu0 0
        %952 = vmatpush1.bf16.msra.mxu0 0
        %953 = vmatprep.subr.bf16.mxu0 0
        %954 = vmatpush1.bf16.msra.mxu0 0
        %955 = vmatprep.subr.bf16.mxu0 0
        %956 = vmatpush1.bf16.msra.mxu0 0
        %957 = vmatprep.subr.bf16.mxu0 0
        %958 = vmatpush1.bf16.msra.mxu0 0
        %959 = vmatprep.subr.bf16.mxu0 0
        %960 = vmatpush1.bf16.msra.mxu0 0
        %961 = vmatprep.subr.bf16.mxu0 0
        %962 = vmatpush1.bf16.msra.mxu0 0
        %963 = vmatprep.subr.bf16.mxu0 0
        %964 = vmatpush1.bf16.msra.mxu0 0
        %965 = vmatprep.subr.bf16.mxu0 0
        %966 = vmatpush1.bf16.msra.mxu0 0
        %967 = vmatprep.subr.bf16.mxu0 0
        %968 = vmatpush1.bf16.msra.mxu0 0
        %969 = vmatprep.subr.bf16.mxu0 0
        %970 = vmatpush1.bf16.msra.mxu0 0
        %971 = vmatprep.mubr.bf16.mxu0 0
        %972 = vmatmul.mubr.bf16.gmra.mrb[0].mxu0 %v576
        %v973 = vpop.f32.mrb[0].mxu0
        %v974 = vadd.f32 0.0, %v973
        %v975 = vpop.f32.mrb[0].mxu0
        %v976 = vpop.f32.mrb[0].mxu0
        %v977 = vpop.f32.mrb[0].mxu0
        %978 = vdwg.mxu0
        %v979 = vpack.c.bf16 %v974, %v974
        %s980 = scalar_lea.vmem [#allocation4], 8
        %981 = vst.msk [vmem:[%s980] sm:$0xf] %vm496, %v979
        %s982 = scalar_lea.vmem %s3, 48
        %v983 = vld [vmem:[%s982] sm:$0xf]
        %v984 = vld [vmem:[%s982 + $0x4] sm:$0xf]
        %v985 = vld [vmem:[%s982 + $0x8] sm:$0xf]
        %v986 = vld [vmem:[%s982 + $0xc] sm:$0xf]
        %v991 = vunpack.c.l.b16 %v983
        %v992 = vunpack.c.l.b16 %v984
        %v993 = vunpack.c.l.b16 %v985
        %v994 = vunpack.c.l.b16 %v986
        %v995 = vpack.c.b16 %v992, %v991
        %v996 = vpack.c.b16 %v994, %v993
        %999 = vmatprep.subr.bf16.mxu0 0
        %1000 = vmatpush1.bf16.msra.mxu0 %v995
        %1001 = vmatprep.subr.bf16.mxu0 0
        %1002 = vmatpush1.bf16.msra.mxu0 %v996
        %1003 = vmatprep.subr.bf16.mxu0 0
        %1004 = vmatpush1.bf16.msra.mxu0 0
        %1005 = vmatprep.subr.bf16.mxu0 0
        %1006 = vmatpush1.bf16.msra.mxu0 0
        %1007 = vmatprep.subr.bf16.mxu0 0
        %1008 = vmatpush1.bf16.msra.mxu0 0
        %1009 = vmatprep.subr.bf16.mxu0 0
        %1010 = vmatpush1.bf16.msra.mxu0 0
        %1011 = vmatprep.subr.bf16.mxu0 0
        %1012 = vmatpush1.bf16.msra.mxu0 0
        %1013 = vmatprep.subr.bf16.mxu0 0
        %1014 = vmatpush1.bf16.msra.mxu0 0
        %1015 = vmatprep.subr.bf16.mxu0 0
        %1016 = vmatpush1.bf16.msra.mxu0 0
        %1017 = vmatprep.subr.bf16.mxu0 0
        %1018 = vmatpush1.bf16.msra.mxu0 0
        %1019 = vmatprep.subr.bf16.mxu0 0
        %1020 = vmatpush1.bf16.msra.mxu0 0
        %1021 = vmatprep.subr.bf16.mxu0 0
        %1022 = vmatpush1.bf16.msra.mxu0 0
        %1023 = vmatprep.subr.bf16.mxu0 0
        %1024 = vmatpush1.bf16.msra.mxu0 0
        %1025 = vmatprep.subr.bf16.mxu0 0
        %1026 = vmatpush1.bf16.msra.mxu0 0
        %1027 = vmatprep.subr.bf16.mxu0 0
        %1028 = vmatpush1.bf16.msra.mxu0 0
        %1029 = vmatprep.subr.bf16.mxu0 0
        %1030 = vmatpush1.bf16.msra.mxu0 0
        %1031 = vmatprep.mubr.bf16.mxu0 0
        %1032 = vmatmul.mubr.bf16.gmra.mrb[0].mxu0 %v452
        %v1033 = vpop.f32.mrb[0].mxu0
        %v1034 = vadd.f32 0.0, %v1033
        %v1035 = vpop.f32.mrb[0].mxu0
        %v1036 = vpop.f32.mrb[0].mxu0
        %v1037 = vpop.f32.mrb[0].mxu0
        %1038 = vdwg.mxu0
        %v1039 = vmul.f32 %v1034, 0.35355338
        %v1040 = vpack.c.bf16 %v1039, %v1039
        %s1041 = scalar_lea.vmem [#allocation2], 12
        %1042 = vst.msk [vmem:[%s1041] sm:$0xf] %vm496, %v1040
        %s1043 = scalar_lea.vmem %s4, 48
        %v1044 = vld [vmem:[%s1043] sm:$0xf]
        %v1045 = vld [vmem:[%s1043 + $0x4] sm:$0xf]
        %v1046 = vld [vmem:[%s1043 + $0x8] sm:$0xf]
        %v1047 = vld [vmem:[%s1043 + $0xc] sm:$0xf]
        %v1052 = vunpack.c.l.b16 %v1044
        %v1053 = vunpack.c.l.b16 %v1045
        %v1054 = vunpack.c.l.b16 %v1046
        %v1055 = vunpack.c.l.b16 %v1047
        %v1056 = vpack.c.b16 %v1053, %v1052
        %v1057 = vpack.c.b16 %v1055, %v1054
        %1060 = vmatprep.subr.bf16.mxu0 0
        %1061 = vmatpush1.bf16.msra.mxu0 %v1056
        %1062 = vmatprep.subr.bf16.mxu0 0
        %1063 = vmatpush1.bf16.msra.mxu0 %v1057
        %1064 = vmatprep.subr.bf16.mxu0 0
        %1065 = vmatpush1.bf16.msra.mxu0 0
        %1066 = vmatprep.subr.bf16.mxu0 0
        %1067 = vmatpush1.bf16.msra.mxu0 0
        %1068 = vmatprep.subr.bf16.mxu0 0
        %1069 = vmatpush1.bf16.msra.mxu0 0
        %1070 = vmatprep.subr.bf16.mxu0 0
        %1071 = vmatpush1.bf16.msra.mxu0 0
        %1072 = vmatprep.subr.bf16.mxu0 0
        %1073 = vmatpush1.bf16.msra.mxu0 0
        %1074 = vmatprep.subr.bf16.mxu0 0
        %1075 = vmatpush1.bf16.msra.mxu0 0
        %1076 = vmatprep.subr.bf16.mxu0 0
        %1077 = vmatpush1.bf16.msra.mxu0 0
        %1078 = vmatprep.subr.bf16.mxu0 0
        %1079 = vmatpush1.bf16.msra.mxu0 0
        %1080 = vmatprep.subr.bf16.mxu0 0
        %1081 = vmatpush1.bf16.msra.mxu0 0
        %1082 = vmatprep.subr.bf16.mxu0 0
        %1083 = vmatpush1.bf16.msra.mxu0 0
        %1084 = vmatprep.subr.bf16.mxu0 0
        %1085 = vmatpush1.bf16.msra.mxu0 0
        %1086 = vmatprep.subr.bf16.mxu0 0
        %1087 = vmatpush1.bf16.msra.mxu0 0
        %1088 = vmatprep.subr.bf16.mxu0 0
        %1089 = vmatpush1.bf16.msra.mxu0 0
        %1090 = vmatprep.subr.bf16.mxu0 0
        %1091 = vmatpush1.bf16.msra.mxu0 0
        %1092 = vmatprep.mubr.bf16.mxu0 0
        %1093 = vmatmul.mubr.bf16.gmra.mrb[0].mxu0 %v515
        %v1094 = vpop.f32.mrb[0].mxu0
        %v1095 = vadd.f32 0.0, %v1094
        %v1096 = vpop.f32.mrb[0].mxu0
        %v1097 = vpop.f32.mrb[0].mxu0
        %v1098 = vpop.f32.mrb[0].mxu0
        %1099 = vdwg.mxu0
        %v1100 = vpack.c.bf16 %v1095, %v1095
        %s1101 = scalar_lea.vmem [#allocation3], 12
        %1102 = vst.msk [vmem:[%s1101] sm:$0xf] %vm496, %v1100
        %s1103 = scalar_lea.vmem %s5, 48
        %v1104 = vld [vmem:[%s1103] sm:$0xf]
        %v1105 = vld [vmem:[%s1103 + $0x4] sm:$0xf]
        %v1106 = vld [vmem:[%s1103 + $0x8] sm:$0xf]
        %v1107 = vld [vmem:[%s1103 + $0xc] sm:$0xf]
        %v1112 = vunpack.c.l.b16 %v1104
        %v1113 = vunpack.c.l.b16 %v1105
        %v1114 = vunpack.c.l.b16 %v1106
        %v1115 = vunpack.c.l.b16 %v1107
        %v1116 = vpack.c.b16 %v1113, %v1112
        %v1117 = vpack.c.b16 %v1115, %v1114
        %1120 = vmatprep.subr.bf16.mxu0 0
        %1121 = vmatpush1.bf16.msra.mxu0 %v1116
        %1122 = vmatprep.subr.bf16.mxu0 0
        %1123 = vmatpush1.bf16.msra.mxu0 %v1117
        %1124 = vmatprep.subr.bf16.mxu0 0
        %1125 = vmatpush1.bf16.msra.mxu0 0
        %1126 = vmatprep.subr.bf16.mxu0 0
        %1127 = vmatpush1.bf16.msra.mxu0 0
        %1128 = vmatprep.subr.bf16.mxu0 0
        %1129 = vmatpush1.bf16.msra.mxu0 0
        %1130 = vmatprep.subr.bf16.mxu0 0
        %1131 = vmatpush1.bf16.msra.mxu0 0
        %1132 = vmatprep.subr.bf16.mxu0 0
        %1133 = vmatpush1.bf16.msra.mxu0 0
        %1134 = vmatprep.subr.bf16.mxu0 0
        %1135 = vmatpush1.bf16.msra.mxu0 0
        %1136 = vmatprep.subr.bf16.mxu0 0
        %1137 = vmatpush1.bf16.msra.mxu0 0
        %1138 = vmatprep.subr.bf16.mxu0 0
        %1139 = vmatpush1.bf16.msra.mxu0 0
        %1140 = vmatprep.subr.bf16.mxu0 0
        %1141 = vmatpush1.bf16.msra.mxu0 0
        %1142 = vmatprep.subr.bf16.mxu0 0
        %1143 = vmatpush1.bf16.msra.mxu0 0
        %1144 = vmatprep.subr.bf16.mxu0 0
        %1145 = vmatpush1.bf16.msra.mxu0 0
        %1146 = vmatprep.subr.bf16.mxu0 0
        %1147 = vmatpush1.bf16.msra.mxu0 0
        %1148 = vmatprep.subr.bf16.mxu0 0
        %1149 = vmatpush1.bf16.msra.mxu0 0
        %1150 = vmatprep.subr.bf16.mxu0 0
        %1151 = vmatpush1.bf16.msra.mxu0 0
        %1152 = vmatprep.mubr.bf16.mxu0 0
        %1153 = vmatmul.mubr.bf16.gmra.mrb[0].mxu0 %v576
        %v1154 = vpop.f32.mrb[0].mxu0
        %v1155 = vadd.f32 0.0, %v1154
        %v1156 = vpop.f32.mrb[0].mxu0
        %v1157 = vpop.f32.mrb[0].mxu0
        %v1158 = vpop.f32.mrb[0].mxu0
        %1159 = vdwg.mxu0
        %v1160 = vpack.c.bf16 %v1155, %v1155
        %s1161 = scalar_lea.vmem [#allocation4], 12
        %1162 = vst.msk [vmem:[%s1161] sm:$0xf] %vm496, %v1160
        %v1163 = vld [vmem:[#allocation2] sm:$0xf]
        %v1164 = vld [vmem:[#allocation2 + $0x4] sm:$0xf]
        %v1165 = vld [vmem:[#allocation2 + $0x8] sm:$0xf]
        %v1166 = vld [vmem:[#allocation2 + $0xc] sm:$0xf]
        %v1167 = vld [vmem:[#allocation3] sm:$0xf]
        %v1168 = vld [vmem:[#allocation3 + $0x4] sm:$0xf]
        %v1169 = vld [vmem:[#allocation3 + $0x8] sm:$0xf]
        %v1170 = vld [vmem:[#allocation3 + $0xc] sm:$0xf]
        %v1171 = vld [vmem:[#allocation4] sm:$0xf]
        %v1172 = vld [vmem:[#allocation4 + $0x4] sm:$0xf]
        %v1173 = vld [vmem:[#allocation4 + $0x8] sm:$0xf]
        %v1174 = vld [vmem:[#allocation4 + $0xc] sm:$0xf]
        %vm1175 = vcmask 64512
        %v1177 = vsel %vm1175, %v1163, 0
        %v1180 = vsel %vm1175, %v1167, 0
        %1182 = vmatprep.subr.bf16.mxu0 0
        %1183 = vmatpush1.bf16.xpose.msra.mxu0 %v1180
        %1184 = vmatprep.subr.bf16.mxu0 0
        %1185 = vmatpush1.bf16.xpose.msra.mxu0 0
        %1186 = vmatprep.subr.bf16.mxu0 0
        %1187 = vmatpush1.bf16.xpose.msra.mxu0 0
        %1188 = vmatprep.subr.bf16.mxu0 0
        %1189 = vmatpush1.bf16.xpose.msra.mxu0 0
        %1190 = vmatprep.subr.bf16.mxu0 0
        %1191 = vmatpush1.bf16.xpose.msra.mxu0 0
        %1192 = vmatprep.subr.bf16.mxu0 0
        %1193 = vmatpush1.bf16.xpose.msra.mxu0 0
        %1194 = vmatprep.subr.bf16.mxu0 0
        %1195 = vmatpush1.bf16.xpose.msra.mxu0 0
        %1196 = vmatprep.subr.bf16.mxu0 0
        %1197 = vmatpush1.bf16.xpose.msra.mxu0 0
        %1198 = vmatprep.subr.bf16.mxu0 0
        %1199 = vmatpush1.bf16.xpose.msra.mxu0 0
        %1200 = vmatprep.subr.bf16.mxu0 0
        %1201 = vmatpush1.bf16.xpose.msra.mxu0 0
        %1202 = vmatprep.subr.bf16.mxu0 0
        %1203 = vmatpush1.bf16.xpose.msra.mxu0 0
        %1204 = vmatprep.subr.bf16.mxu0 0
        %1205 = vmatpush1.bf16.xpose.msra.mxu0 0
        %1206 = vmatprep.subr.bf16.mxu0 0
        %1207 = vmatpush1.bf16.xpose.msra.mxu0 0
        %1208 = vmatprep.subr.bf16.mxu0 0
        %1209 = vmatpush1.bf16.xpose.msra.mxu0 0
        %1210 = vmatprep.subr.bf16.mxu0 0
        %1211 = vmatpush1.bf16.xpose.msra.mxu0 0
        %1212 = vmatprep.subr.bf16.mxu0 0
        %1213 = vmatpush1.bf16.xpose.msra.mxu0 0
        %1214 = vmatprep.mubr.bf16.mxu0 0
        %1215 = vmatmul.mubr.bf16.gmra.mrb[0].mxu0 %v1177
        %v1216 = vpop.f32.mrb[0].mxu0
        %v1217 = vadd.f32 0.0, %v1216
        %v1218 = vpop.f32.mrb[0].mxu0
        %v1219 = vpop.f32.mrb[0].mxu0
        %v1220 = vpop.f32.mrb[0].mxu0
        %1221 = vdwg.mxu0
        %v1223 = vsel %vm1175, %v1164, 0
        %v1226 = vsel %vm1175, %v1168, 0
        %1228 = vmatprep.subr.bf16.mxu0 0
        %1229 = vmatpush1.bf16.xpose.msra.mxu0 %v1226
        %1230 = vmatprep.subr.bf16.mxu0 0
        %1231 = vmatpush1.bf16.xpose.msra.mxu0 0
        %1232 = vmatprep.subr.bf16.mxu0 0
        %1233 = vmatpush1.bf16.xpose.msra.mxu0 0
        %1234 = vmatprep.subr.bf16.mxu0 0
        %1235 = vmatpush1.bf16.xpose.msra.mxu0 0
        %1236 = vmatprep.subr.bf16.mxu0 0
        %1237 = vmatpush1.bf16.xpose.msra.mxu0 0
        %1238 = vmatprep.subr.bf16.mxu0 0
        %1239 = vmatpush1.bf16.xpose.msra.mxu0 0
        %1240 = vmatprep.subr.bf16.mxu0 0
        %1241 = vmatpush1.bf16.xpose.msra.mxu0 0
        %1242 = vmatprep.subr.bf16.mxu0 0
        %1243 = vmatpush1.bf16.xpose.msra.mxu0 0
        %1244 = vmatprep.subr.bf16.mxu0 0
        %1245 = vmatpush1.bf16.xpose.msra.mxu0 0
        %1246 = vmatprep.subr.bf16.mxu0 0
        %1247 = vmatpush1.bf16.xpose.msra.mxu0 0
        %1248 = vmatprep.subr.bf16.mxu0 0
        %1249 = vmatpush1.bf16.xpose.msra.mxu0 0
        %1250 = vmatprep.subr.bf16.mxu0 0
        %1251 = vmatpush1.bf16.xpose.msra.mxu0 0
        %1252 = vmatprep.subr.bf16.mxu0 0
        %1253 = vmatpush1.bf16.xpose.msra.mxu0 0
        %1254 = vmatprep.subr.bf16.mxu0 0
        %1255 = vmatpush1.bf16.xpose.msra.mxu0 0
        %1256 = vmatprep.subr.bf16.mxu0 0
        %1257 = vmatpush1.bf16.xpose.msra.mxu0 0
        %1258 = vmatprep.subr.bf16.mxu0 0
        %1259 = vmatpush1.bf16.xpose.msra.mxu0 0
        %1260 = vmatprep.mubr.bf16.mxu0 0
        %1261 = vmatmul.mubr.bf16.gmra.mrb[0].mxu0 %v1223
        %v1262 = vpop.f32.mrb[0].mxu0
        %v1263 = vadd.f32 0.0, %v1262
        %v1264 = vpop.f32.mrb[0].mxu0
        %v1265 = vpop.f32.mrb[0].mxu0
        %v1266 = vpop.f32.mrb[0].mxu0
        %1267 = vdwg.mxu0
        %v1269 = vsel %vm1175, %v1165, 0
        %v1272 = vsel %vm1175, %v1169, 0
        %1274 = vmatprep.subr.bf16.mxu0 0
        %1275 = vmatpush1.bf16.xpose.msra.mxu0 %v1272
        %1276 = vmatprep.subr.bf16.mxu0 0
        %1277 = vmatpush1.bf16.xpose.msra.mxu0 0
        %1278 = vmatprep.subr.bf16.mxu0 0
        %1279 = vmatpush1.bf16.xpose.msra.mxu0 0
        %1280 = vmatprep.subr.bf16.mxu0 0
        %1281 = vmatpush1.bf16.xpose.msra.mxu0 0
        %1282 = vmatprep.subr.bf16.mxu0 0
        %1283 = vmatpush1.bf16.xpose.msra.mxu0 0
        %1284 = vmatprep.subr.bf16.mxu0 0
        %1285 = vmatpush1.bf16.xpose.msra.mxu0 0
        %1286 = vmatprep.subr.bf16.mxu0 0
        %1287 = vmatpush1.bf16.xpose.msra.mxu0 0
        %1288 = vmatprep.subr.bf16.mxu0 0
        %1289 = vmatpush1.bf16.xpose.msra.mxu0 0
        %1290 = vmatprep.subr.bf16.mxu0 0
        %1291 = vmatpush1.bf16.xpose.msra.mxu0 0
        %1292 = vmatprep.subr.bf16.mxu0 0
        %1293 = vmatpush1.bf16.xpose.msra.mxu0 0
        %1294 = vmatprep.subr.bf16.mxu0 0
        %1295 = vmatpush1.bf16.xpose.msra.mxu0 0
        %1296 = vmatprep.subr.bf16.mxu0 0
        %1297 = vmatpush1.bf16.xpose.msra.mxu0 0
        %1298 = vmatprep.subr.bf16.mxu0 0
        %1299 = vmatpush1.bf16.xpose.msra.mxu0 0
        %1300 = vmatprep.subr.bf16.mxu0 0
        %1301 = vmatpush1.bf16.xpose.msra.mxu0 0
        %1302 = vmatprep.subr.bf16.mxu0 0
        %1303 = vmatpush1.bf16.xpose.msra.mxu0 0
        %1304 = vmatprep.subr.bf16.mxu0 0
        %1305 = vmatpush1.bf16.xpose.msra.mxu0 0
        %1306 = vmatprep.mubr.bf16.mxu0 0
        %1307 = vmatmul.mubr.bf16.gmra.mrb[0].mxu0 %v1269
        %v1308 = vpop.f32.mrb[0].mxu0
        %v1309 = vadd.f32 0.0, %v1308
        %v1310 = vpop.f32.mrb[0].mxu0
        %v1311 = vpop.f32.mrb[0].mxu0
        %v1312 = vpop.f32.mrb[0].mxu0
        %1313 = vdwg.mxu0
        %v1315 = vsel %vm1175, %v1166, 0
        %v1318 = vsel %vm1175, %v1170, 0
        %1320 = vmatprep.subr.bf16.mxu0 0
        %1321 = vmatpush1.bf16.xpose.msra.mxu0 %v1318
        %1322 = vmatprep.subr.bf16.mxu0 0
        %1323 = vmatpush1.bf16.xpose.msra.mxu0 0
        %1324 = vmatprep.subr.bf16.mxu0 0
        %1325 = vmatpush1.bf16.xpose.msra.mxu0 0
        %1326 = vmatprep.subr.bf16.mxu0 0
        %1327 = vmatpush1.bf16.xpose.msra.mxu0 0
        %1328 = vmatprep.subr.bf16.mxu0 0
        %1329 = vmatpush1.bf16.xpose.msra.mxu0 0
        %1330 = vmatprep.subr.bf16.mxu0 0
        %1331 = vmatpush1.bf16.xpose.msra.mxu0 0
        %1332 = vmatprep.subr.bf16.mxu0 0
        %1333 = vmatpush1.bf16.xpose.msra.mxu0 0
        %1334 = vmatprep.subr.bf16.mxu0 0
        %1335 = vmatpush1.bf16.xpose.msra.mxu0 0
        %1336 = vmatprep.subr.bf16.mxu0 0
        %1337 = vmatpush1.bf16.xpose.msra.mxu0 0
        %1338 = vmatprep.subr.bf16.mxu0 0
        %1339 = vmatpush1.bf16.xpose.msra.mxu0 0
        %1340 = vmatprep.subr.bf16.mxu0 0
        %1341 = vmatpush1.bf16.xpose.msra.mxu0 0
        %1342 = vmatprep.subr.bf16.mxu0 0
        %1343 = vmatpush1.bf16.xpose.msra.mxu0 0
        %1344 = vmatprep.subr.bf16.mxu0 0
        %1345 = vmatpush1.bf16.xpose.msra.mxu0 0
        %1346 = vmatprep.subr.bf16.mxu0 0
        %1347 = vmatpush1.bf16.xpose.msra.mxu0 0
        %1348 = vmatprep.subr.bf16.mxu0 0
        %1349 = vmatpush1.bf16.xpose.msra.mxu0 0
        %1350 = vmatprep.subr.bf16.mxu0 0
        %1351 = vmatpush1.bf16.xpose.msra.mxu0 0
        %1352 = vmatprep.mubr.bf16.mxu0 0
        %1353 = vmatmul.mubr.bf16.gmra.mrb[0].mxu0 %v1315
        %v1354 = vpop.f32.mrb[0].mxu0
        %v1355 = vadd.f32 0.0, %v1354
        %v1356 = vpop.f32.mrb[0].mxu0
        %v1357 = vpop.f32.mrb[0].mxu0
        %v1358 = vpop.f32.mrb[0].mxu0
        %1359 = vdwg.mxu0
        %v1360 = vsel %vm1175, %v1217, -inf
        %1361 = vmax.xlane.f32.xlu0 %v1360
        %v1362 = vpop.xlane.xlu0 %1361
        %v1363 = vsel %vm1175, %v1263, -inf
        %1364 = vmax.xlane.f32.xlu0 %v1363
        %v1365 = vpop.xlane.xlu0 %1364
        %v1366 = vsel %vm1175, %v1309, -inf
        %1367 = vmax.xlane.f32.xlu0 %v1366
        %v1368 = vpop.xlane.xlu0 %1367
        %v1369 = vsel %vm1175, %v1355, -inf
        %1370 = vmax.xlane.f32.xlu0 %v1369
        %v1371 = vpop.xlane.xlu0 %1370
        %v1372 = vsub.f32 %v1217, %v1362
        %v1373 = vsub.f32 %v1263, %v1365
        %v1374 = vsub.f32 %v1309, %v1368
        %v1375 = vsub.f32 %v1355, %v1371
        %v1376 = vmul.f32 %v1372, 1.442695
        %v1377 = vpow.pop %v1376
        %v1378 = vmul.f32 %v1373, 1.442695
        %v1379 = vpow.pop %v1378
        %v1380 = vmul.f32 %v1374, 1.442695
        %v1381 = vpow.pop %v1380
        %v1382 = vmul.f32 %v1375, 1.442695
        %v1383 = vpow.pop %v1382
        %v1384 = vsel %vm1175, %v1377, 0.0
        %1385 = vadd.xlane.f32.xlu0 %v1384
        %v1386 = vpop.xlane.xlu0 %1385
        %v1387 = vsel %vm1175, %v1379, 0.0
        %1388 = vadd.xlane.f32.xlu0 %v1387
        %v1389 = vpop.xlane.xlu0 %1388
        %v1390 = vsel %vm1175, %v1381, 0.0
        %1391 = vadd.xlane.f32.xlu0 %v1390
        %v1392 = vpop.xlane.xlu0 %1391
        %v1393 = vsel %vm1175, %v1383, 0.0
        %1394 = vadd.xlane.f32.xlu0 %v1393
        %v1395 = vpop.xlane.xlu0 %1394
        %v1396 = vrcp.pop %v1386
        %v1397 = vrcp.pop %v1389
        %v1398 = vrcp.pop %v1392
        %v1399 = vrcp.pop %v1395
        %v1400 = vmul.f32 %v1377, %v1396
        %v1401 = vmul.f32 %v1379, %v1397
        %v1402 = vmul.f32 %v1381, %v1398
        %v1403 = vmul.f32 %v1383, %v1399
        %1404 = vst.msk [vmem:[%s411] sm:$0xff] %vm1175, %v1400
        %1405 = vst.msk [vmem:[%s411 + $0x8] sm:$0xff] %vm1175, %v1401
        %1406 = vst.msk [vmem:[%s411 + $0x10] sm:$0xff] %vm1175, %v1402
        %1407 = vst.msk [vmem:[%s411 + $0x18] sm:$0xff] %vm1175, %v1403
        %v1408 = vpack.c.bf16 %v1400, %v1400
        %v1409 = vpack.c.bf16 %v1401, %v1401
        %v1410 = vpack.c.bf16 %v1402, %v1402
        %v1411 = vpack.c.bf16 %v1403, %v1403
        %v1413 = vsel %vm1175, %v1408, 0
        %vm1415 = vcmask 1043456
        %v1417 = vsel %vm1415, %v1171, 0
        %1419 = vmatprep.subr.bf16.mxu0 0
        %1420 = vmatpush1.bf16.msra.mxu0 %v1417
        %1421 = vmatprep.subr.bf16.mxu0 0
        %1422 = vmatpush1.bf16.msra.mxu0 0
        %1423 = vmatprep.subr.bf16.mxu0 0
        %1424 = vmatpush1.bf16.msra.mxu0 0
        %1425 = vmatprep.subr.bf16.mxu0 0
        %1426 = vmatpush1.bf16.msra.mxu0 0
        %1427 = vmatprep.subr.bf16.mxu0 0
        %1428 = vmatpush1.bf16.msra.mxu0 0
        %1429 = vmatprep.subr.bf16.mxu0 0
        %1430 = vmatpush1.bf16.msra.mxu0 0
        %1431 = vmatprep.subr.bf16.mxu0 0
        %1432 = vmatpush1.bf16.msra.mxu0 0
        %1433 = vmatprep.subr.bf16.mxu0 0
        %1434 = vmatpush1.bf16.msra.mxu0 0
        %1435 = vmatprep.subr.bf16.mxu0 0
        %1436 = vmatpush1.bf16.msra.mxu0 0
        %1437 = vmatprep.subr.bf16.mxu0 0
        %1438 = vmatpush1.bf16.msra.mxu0 0
        %1439 = vmatprep.subr.bf16.mxu0 0
        %1440 = vmatpush1.bf16.msra.mxu0 0
        %1441 = vmatprep.subr.bf16.mxu0 0
        %1442 = vmatpush1.bf16.msra.mxu0 0
        %1443 = vmatprep.subr.bf16.mxu0 0
        %1444 = vmatpush1.bf16.msra.mxu0 0
        %1445 = vmatprep.subr.bf16.mxu0 0
        %1446 = vmatpush1.bf16.msra.mxu0 0
        %1447 = vmatprep.subr.bf16.mxu0 0
        %1448 = vmatpush1.bf16.msra.mxu0 0
        %1449 = vmatprep.subr.bf16.mxu0 0
        %1450 = vmatpush1.bf16.msra.mxu0 0
        %1451 = vmatprep.mubr.bf16.mxu0 0
        %1452 = vmatmul.mubr.bf16.gmra.mrb[0].mxu0 %v1413
        %v1453 = vpop.f32.mrb[0].mxu0
        %v1454 = vadd.f32 0.0, %v1453
        %v1455 = vpop.f32.mrb[0].mxu0
        %v1456 = vpop.f32.mrb[0].mxu0
        %v1457 = vpop.f32.mrb[0].mxu0
        %1458 = vdwg.mxu0
        %v1460 = vsel %vm1175, %v1409, 0
        %v1463 = vsel %vm1415, %v1172, 0
        %1465 = vmatprep.subr.bf16.mxu0 0
        %1466 = vmatpush1.bf16.msra.mxu0 %v1463
        %1467 = vmatprep.subr.bf16.mxu0 0
        %1468 = vmatpush1.bf16.msra.mxu0 0
        %1469 = vmatprep.subr.bf16.mxu0 0
        %1470 = vmatpush1.bf16.msra.mxu0 0
        %1471 = vmatprep.subr.bf16.mxu0 0
        %1472 = vmatpush1.bf16.msra.mxu0 0
        %1473 = vmatprep.subr.bf16.mxu0 0
        %1474 = vmatpush1.bf16.msra.mxu0 0
        %1475 = vmatprep.subr.bf16.mxu0 0
        %1476 = vmatpush1.bf16.msra.mxu0 0
        %1477 = vmatprep.subr.bf16.mxu0 0
        %1478 = vmatpush1.bf16.msra.mxu0 0
        %1479 = vmatprep.subr.bf16.mxu0 0
        %1480 = vmatpush1.bf16.msra.mxu0 0
        %1481 = vmatprep.subr.bf16.mxu0 0
        %1482 = vmatpush1.bf16.msra.mxu0 0
        %1483 = vmatprep.subr.bf16.mxu0 0
        %1484 = vmatpush1.bf16.msra.mxu0 0
        %1485 = vmatprep.subr.bf16.mxu0 0
        %1486 = vmatpush1.bf16.msra.mxu0 0
        %1487 = vmatprep.subr.bf16.mxu0 0
        %1488 = vmatpush1.bf16.msra.mxu0 0
        %1489 = vmatprep.subr.bf16.mxu0 0
        %1490 = vmatpush1.bf16.msra.mxu0 0
        %1491 = vmatprep.subr.bf16.mxu0 0
        %1492 = vmatpush1.bf16.msra.mxu0 0
        %1493 = vmatprep.subr.bf16.mxu0 0
        %1494 = vmatpush1.bf16.msra.mxu0 0
        %1495 = vmatprep.subr.bf16.mxu0 0
        %1496 = vmatpush1.bf16.msra.mxu0 0
        %1497 = vmatprep.mubr.bf16.mxu0 0
        %1498 = vmatmul.mubr.bf16.gmra.mrb[0].mxu0 %v1460
        %v1499 = vpop.f32.mrb[0].mxu0
        %v1500 = vadd.f32 0.0, %v1499
        %v1501 = vpop.f32.mrb[0].mxu0
        %v1502 = vpop.f32.mrb[0].mxu0
        %v1503 = vpop.f32.mrb[0].mxu0
        %1504 = vdwg.mxu0
        %v1506 = vsel %vm1175, %v1410, 0
        %v1509 = vsel %vm1415, %v1173, 0
        %1511 = vmatprep.subr.bf16.mxu0 0
        %1512 = vmatpush1.bf16.msra.mxu0 %v1509
        %1513 = vmatprep.subr.bf16.mxu0 0
        %1514 = vmatpush1.bf16.msra.mxu0 0
        %1515 = vmatprep.subr.bf16.mxu0 0
        %1516 = vmatpush1.bf16.msra.mxu0 0
        %1517 = vmatprep.subr.bf16.mxu0 0
        %1518 = vmatpush1.bf16.msra.mxu0 0
        %1519 = vmatprep.subr.bf16.mxu0 0
        %1520 = vmatpush1.bf16.msra.mxu0 0
        %1521 = vmatprep.subr.bf16.mxu0 0
        %1522 = vmatpush1.bf16.msra.mxu0 0
        %1523 = vmatprep.subr.bf16.mxu0 0
        %1524 = vmatpush1.bf16.msra.mxu0 0
        %1525 = vmatprep.subr.bf16.mxu0 0
        %1526 = vmatpush1.bf16.msra.mxu0 0
        %1527 = vmatprep.subr.bf16.mxu0 0
        %1528 = vmatpush1.bf16.msra.mxu0 0
        %1529 = vmatprep.subr.bf16.mxu0 0
        %1530 = vmatpush1.bf16.msra.mxu0 0
        %1531 = vmatprep.subr.bf16.mxu0 0
        %1532 = vmatpush1.bf16.msra.mxu0 0
        %1533 = vmatprep.subr.bf16.mxu0 0
        %1534 = vmatpush1.bf16.msra.mxu0 0
        %1535 = vmatprep.subr.bf16.mxu0 0
        %1536 = vmatpush1.bf16.msra.mxu0 0
        %1537 = vmatprep.subr.bf16.mxu0 0
        %1538 = vmatpush1.bf16.msra.mxu0 0
        %1539 = vmatprep.subr.bf16.mxu0 0
        %1540 = vmatpush1.bf16.msra.mxu0 0
        %1541 = vmatprep.subr.bf16.mxu0 0
        %1542 = vmatpush1.bf16.msra.mxu0 0
        %1543 = vmatprep.mubr.bf16.mxu0 0
        %1544 = vmatmul.mubr.bf16.gmra.mrb[0].mxu0 %v1506
        %v1545 = vpop.f32.mrb[0].mxu0
        %v1546 = vadd.f32 0.0, %v1545
        %v1547 = vpop.f32.mrb[0].mxu0
        %v1548 = vpop.f32.mrb[0].mxu0
        %v1549 = vpop.f32.mrb[0].mxu0
        %1550 = vdwg.mxu0
        %v1552 = vsel %vm1175, %v1411, 0
        %v1555 = vsel %vm1415, %v1174, 0
        %1557 = vmatprep.subr.bf16.mxu0 0
        %1558 = vmatpush1.bf16.msra.mxu0 %v1555
        %1559 = vmatprep.subr.bf16.mxu0 0
        %1560 = vmatpush1.bf16.msra.mxu0 0
        %1561 = vmatprep.subr.bf16.mxu0 0
        %1562 = vmatpush1.bf16.msra.mxu0 0
        %1563 = vmatprep.subr.bf16.mxu0 0
        %1564 = vmatpush1.bf16.msra.mxu0 0
        %1565 = vmatprep.subr.bf16.mxu0 0
        %1566 = vmatpush1.bf16.msra.mxu0 0
        %1567 = vmatprep.subr.bf16.mxu0 0
        %1568 = vmatpush1.bf16.msra.mxu0 0
        %1569 = vmatprep.subr.bf16.mxu0 0
        %1570 = vmatpush1.bf16.msra.mxu0 0
        %1571 = vmatprep.subr.bf16.mxu0 0
        %1572 = vmatpush1.bf16.msra.mxu0 0
        %1573 = vmatprep.subr.bf16.mxu0 0
        %1574 = vmatpush1.bf16.msra.mxu0 0
        %1575 = vmatprep.subr.bf16.mxu0 0
        %1576 = vmatpush1.bf16.msra.mxu0 0
        %1577 = vmatprep.subr.bf16.mxu0 0
        %1578 = vmatpush1.bf16.msra.mxu0 0
        %1579 = vmatprep.subr.bf16.mxu0 0
        %1580 = vmatpush1.bf16.msra.mxu0 0
        %1581 = vmatprep.subr.bf16.mxu0 0
        %1582 = vmatpush1.bf16.msra.mxu0 0
        %1583 = vmatprep.subr.bf16.mxu0 0
        %1584 = vmatpush1.bf16.msra.mxu0 0
        %1585 = vmatprep.subr.bf16.mxu0 0
        %1586 = vmatpush1.bf16.msra.mxu0 0
        %1587 = vmatprep.subr.bf16.mxu0 0
        %1588 = vmatpush1.bf16.msra.mxu0 0
        %1589 = vmatprep.mubr.bf16.mxu0 0
        %1590 = vmatmul.mubr.bf16.gmra.mrb[0].mxu0 %v1552
        %v1591 = vpop.f32.mrb[0].mxu0
        %v1592 = vadd.f32 0.0, %v1591
        %v1593 = vpop.f32.mrb[0].mxu0
        %v1594 = vpop.f32.mrb[0].mxu0
        %v1595 = vpop.f32.mrb[0].mxu0
        %1596 = vdwg.mxu0
        %v1597 = vpack.c.bf16 %v1454, %v1454
        %v1598 = vpack.c.bf16 %v1500, %v1500
        %v1599 = vpack.c.bf16 %v1546, %v1546
        %v1600 = vpack.c.bf16 %v1592, %v1592
        %v1601 = vld [vmem:[%s6] sm:$0xf]
        %v1602 = vld [vmem:[%s6 + $0x4] sm:$0xf]
        %v1603 = vld [vmem:[%s6 + $0x8] sm:$0xf]
        %v1604 = vld [vmem:[%s6 + $0xc] sm:$0xf]
        %v1606 = vsel %vm1175, %v1597, 0
        %v1609 = vsel %vm1415, %v1601, 0
        %1611 = vmatprep.subr.bf16.mxu0 0
        %1612 = vmatpush1.bf16.msra.mxu0 %v1609
        %1613 = vmatprep.subr.bf16.mxu0 0
        %1614 = vmatpush1.bf16.msra.mxu0 0
        %1615 = vmatprep.subr.bf16.mxu0 0
        %1616 = vmatpush1.bf16.msra.mxu0 0
        %1617 = vmatprep.subr.bf16.mxu0 0
        %1618 = vmatpush1.bf16.msra.mxu0 0
        %1619 = vmatprep.subr.bf16.mxu0 0
        %1620 = vmatpush1.bf16.msra.mxu0 0
        %1621 = vmatprep.subr.bf16.mxu0 0
        %1622 = vmatpush1.bf16.msra.mxu0 0
        %1623 = vmatprep.subr.bf16.mxu0 0
        %1624 = vmatpush1.bf16.msra.mxu0 0
        %1625 = vmatprep.subr.bf16.mxu0 0
        %1626 = vmatpush1.bf16.msra.mxu0 0
        %1627 = vmatprep.subr.bf16.mxu0 0
        %1628 = vmatpush1.bf16.msra.mxu0 0
        %1629 = vmatprep.subr.bf16.mxu0 0
        %1630 = vmatpush1.bf16.msra.mxu0 0
        %1631 = vmatprep.subr.bf16.mxu0 0
        %1632 = vmatpush1.bf16.msra.mxu0 0
        %1633 = vmatprep.subr.bf16.mxu0 0
        %1634 = vmatpush1.bf16.msra.mxu0 0
        %1635 = vmatprep.subr.bf16.mxu0 0
        %1636 = vmatpush1.bf16.msra.mxu0 0
        %1637 = vmatprep.subr.bf16.mxu0 0
        %1638 = vmatpush1.bf16.msra.mxu0 0
        %1639 = vmatprep.subr.bf16.mxu0 0
        %1640 = vmatpush1.bf16.msra.mxu0 0
        %1641 = vmatprep.subr.bf16.mxu0 0
        %1642 = vmatpush1.bf16.msra.mxu0 0
        %1643 = vmatprep.mubr.bf16.mxu0 0
        %1644 = vmatmul.mubr.bf16.gmra.mrb[0].mxu0 %v1606
        %v1645 = vpop.f32.mrb[0].mxu0
        %v1646 = vadd.f32 0.0, %v1645
        %v1647 = vpop.f32.mrb[0].mxu0
        %v1648 = vpop.f32.mrb[0].mxu0
        %v1649 = vpop.f32.mrb[0].mxu0
        %1650 = vdwg.mxu0
        %v1652 = vsel %vm1175, %v1598, 0
        %v1655 = vsel %vm1415, %v1602, 0
        %1657 = vmatprep.subr.bf16.mxu0 0
        %1658 = vmatpush1.bf16.msra.mxu0 %v1655
        %1659 = vmatprep.subr.bf16.mxu0 0
        %1660 = vmatpush1.bf16.msra.mxu0 0
        %1661 = vmatprep.subr.bf16.mxu0 0
        %1662 = vmatpush1.bf16.msra.mxu0 0
        %1663 = vmatprep.subr.bf16.mxu0 0
        %1664 = vmatpush1.bf16.msra.mxu0 0
        %1665 = vmatprep.subr.bf16.mxu0 0
        %1666 = vmatpush1.bf16.msra.mxu0 0
        %1667 = vmatprep.subr.bf16.mxu0 0
        %1668 = vmatpush1.bf16.msra.mxu0 0
        %1669 = vmatprep.subr.bf16.mxu0 0
        %1670 = vmatpush1.bf16.msra.mxu0 0
        %1671 = vmatprep.subr.bf16.mxu0 0
        %1672 = vmatpush1.bf16.msra.mxu0 0
        %1673 = vmatprep.subr.bf16.mxu0 0
        %1674 = vmatpush1.bf16.msra.mxu0 0
        %1675 = vmatprep.subr.bf16.mxu0 0
        %1676 = vmatpush1.bf16.msra.mxu0 0
        %1677 = vmatprep.subr.bf16.mxu0 0
        %1678 = vmatpush1.bf16.msra.mxu0 0
        %1679 = vmatprep.subr.bf16.mxu0 0
        %1680 = vmatpush1.bf16.msra.mxu0 0
        %1681 = vmatprep.subr.bf16.mxu0 0
        %1682 = vmatpush1.bf16.msra.mxu0 0
        %1683 = vmatprep.subr.bf16.mxu0 0
        %1684 = vmatpush1.bf16.msra.mxu0 0
        %1685 = vmatprep.subr.bf16.mxu0 0
        %1686 = vmatpush1.bf16.msra.mxu0 0
        %1687 = vmatprep.subr.bf16.mxu0 0
        %1688 = vmatpush1.bf16.msra.mxu0 0
        %1689 = vmatprep.mubr.bf16.mxu0 0
        %1690 = vmatmul.mubr.bf16.gmra.mrb[0].mxu0 %v1652
        %v1691 = vpop.f32.mrb[0].mxu0
        %v1692 = vadd.f32 0.0, %v1691
        %v1693 = vpop.f32.mrb[0].mxu0
        %v1694 = vpop.f32.mrb[0].mxu0
        %v1695 = vpop.f32.mrb[0].mxu0
        %1696 = vdwg.mxu0
        %v1698 = vsel %vm1175, %v1599, 0
        %v1701 = vsel %vm1415, %v1603, 0
        %1703 = vmatprep.subr.bf16.mxu0 0
        %1704 = vmatpush1.bf16.msra.mxu0 %v1701
        %1705 = vmatprep.subr.bf16.mxu0 0
        %1706 = vmatpush1.bf16.msra.mxu0 0
        %1707 = vmatprep.subr.bf16.mxu0 0
        %1708 = vmatpush1.bf16.msra.mxu0 0
        %1709 = vmatprep.subr.bf16.mxu0 0
        %1710 = vmatpush1.bf16.msra.mxu0 0
        %1711 = vmatprep.subr.bf16.mxu0 0
        %1712 = vmatpush1.bf16.msra.mxu0 0
        %1713 = vmatprep.subr.bf16.mxu0 0
        %1714 = vmatpush1.bf16.msra.mxu0 0
        %1715 = vmatprep.subr.bf16.mxu0 0
        %1716 = vmatpush1.bf16.msra.mxu0 0
        %1717 = vmatprep.subr.bf16.mxu0 0
        %1718 = vmatpush1.bf16.msra.mxu0 0
        %1719 = vmatprep.subr.bf16.mxu0 0
        %1720 = vmatpush1.bf16.msra.mxu0 0
        %1721 = vmatprep.subr.bf16.mxu0 0
        %1722 = vmatpush1.bf16.msra.mxu0 0
        %1723 = vmatprep.subr.bf16.mxu0 0
        %1724 = vmatpush1.bf16.msra.mxu0 0
        %1725 = vmatprep.subr.bf16.mxu0 0
        %1726 = vmatpush1.bf16.msra.mxu0 0
        %1727 = vmatprep.subr.bf16.mxu0 0
        %1728 = vmatpush1.bf16.msra.mxu0 0
        %1729 = vmatprep.subr.bf16.mxu0 0
        %1730 = vmatpush1.bf16.msra.mxu0 0
        %1731 = vmatprep.subr.bf16.mxu0 0
        %1732 = vmatpush1.bf16.msra.mxu0 0
        %1733 = vmatprep.subr.bf16.mxu0 0
        %1734 = vmatpush1.bf16.msra.mxu0 0
        %1735 = vmatprep.mubr.bf16.mxu0 0
        %1736 = vmatmul.mubr.bf16.gmra.mrb[0].mxu0 %v1698
        %v1737 = vpop.f32.mrb[0].mxu0
        %v1738 = vadd.f32 0.0, %v1737
        %v1739 = vpop.f32.mrb[0].mxu0
        %v1740 = vpop.f32.mrb[0].mxu0
        %v1741 = vpop.f32.mrb[0].mxu0
        %1742 = vdwg.mxu0
        %v1744 = vsel %vm1175, %v1600, 0
        %v1747 = vsel %vm1415, %v1604, 0
        %1749 = vmatprep.subr.bf16.mxu0 0
        %1750 = vmatpush1.bf16.msra.mxu0 %v1747
        %1751 = vmatprep.subr.bf16.mxu0 0
        %1752 = vmatpush1.bf16.msra.mxu0 0
        %1753 = vmatprep.subr.bf16.mxu0 0
        %1754 = vmatpush1.bf16.msra.mxu0 0
        %1755 = vmatprep.subr.bf16.mxu0 0
        %1756 = vmatpush1.bf16.msra.mxu0 0
        %1757 = vmatprep.subr.bf16.mxu0 0
        %1758 = vmatpush1.bf16.msra.mxu0 0
        %1759 = vmatprep.subr.bf16.mxu0 0
        %1760 = vmatpush1.bf16.msra.mxu0 0
        %1761 = vmatprep.subr.bf16.mxu0 0
        %1762 = vmatpush1.bf16.msra.mxu0 0
        %1763 = vmatprep.subr.bf16.mxu0 0
        %1764 = vmatpush1.bf16.msra.mxu0 0
        %1765 = vmatprep.subr.bf16.mxu0 0
        %1766 = vmatpush1.bf16.msra.mxu0 0
        %1767 = vmatprep.subr.bf16.mxu0 0
        %1768 = vmatpush1.bf16.msra.mxu0 0
        %1769 = vmatprep.subr.bf16.mxu0 0
        %1770 = vmatpush1.bf16.msra.mxu0 0
        %1771 = vmatprep.subr.bf16.mxu0 0
        %1772 = vmatpush1.bf16.msra.mxu0 0
        %1773 = vmatprep.subr.bf16.mxu0 0
        %1774 = vmatpush1.bf16.msra.mxu0 0
        %1775 = vmatprep.subr.bf16.mxu0 0
        %1776 = vmatpush1.bf16.msra.mxu0 0
        %1777 = vmatprep.subr.bf16.mxu0 0
        %1778 = vmatpush1.bf16.msra.mxu0 0
        %1779 = vmatprep.subr.bf16.mxu0 0
        %1780 = vmatpush1.bf16.msra.mxu0 0
        %1781 = vmatprep.mubr.bf16.mxu0 0
        %1782 = vmatmul.mubr.bf16.gmra.mrb[0].mxu0 %v1744
        %v1783 = vpop.f32.mrb[0].mxu0
        %v1784 = vadd.f32 0.0, %v1783
        %v1785 = vpop.f32.mrb[0].mxu0
        %v1786 = vpop.f32.mrb[0].mxu0
        %v1787 = vpop.f32.mrb[0].mxu0
        %1788 = vdwg.mxu0
        %v1789 = vsel %vm450, %v1646, 0.0
        %v1790 = vsel %vm450, %v1692, 0.0
        %v1791 = vadd.f32 %v1789, %v1790
        %v1792 = vsel %vm450, %v1738, 0.0
        %v1793 = vadd.f32 %v1791, %v1792
        %v1794 = vsel %vm450, %v1784, 0.0
        %v1795 = vadd.f32 %v1793, %v1794
        %v1796 = vadd.f32 %v1795, %v428
        %v1797 = vsel %vm450, %v1796, 0.0
        %1798 = vadd.xlane.f32.xlu0 %v1797
        %v1799 = vpop.xlane.xlu0 %1798
        %v1800 = vrcp.pop 32.0
        %v1801 = vmul.f32 %v1799, %v1800
        %v1802 = vsub.f32 %v1796, %v1801
        %v1803 = vmul.f32 %v1802, %v1802
        %v1804 = vsel %vm450, %v1803, 0.0
        %1805 = vadd.xlane.f32.xlu0 %v1804
        %v1806 = vpop.xlane.xlu0 %1805
        %v1807 = vmul.f32 %v1806, %v1800
        %v1808 = vadd.f32 %v1807, 1e-06
        %v1809 = vrsqrt.pop %v1808
        %v1810 = vmul.f32 %v1802, %v1809
        %v1811 = vld [vmem:[%s7] sm:$0x1]
        %v1813 = vlaneseq
        %v1814 = vshrl.u32 %v1813, 7
        %v1815 = vsub.s32 0, %v1814
        %v1816 = vrot.slane %v1811, %v1815
        %v1818 = vmul.f32 %v1810, %v1816
        %v1819 = vld [vmem:[%s8] sm:$0x1]
        %v1821 = vlaneseq
        %v1822 = vshrl.u32 %v1821, 7
        %v1823 = vsub.s32 0, %v1822
        %v1824 = vrot.slane %v1819, %v1823
        %v1826 = vadd.f32 %v1818, %v1824
        %1827 = vst.msk [vmem:[%s404] sm:$0xff] %vm450, %v1826
        %s1828 = sand.u32 %s256, 1
        %s1829 = scalar_lea.sflag [#allocation6], %s1828
        %s1830 = sand.u32 %s256, 1
        %s1831 = smul.addr %s1830, 8
        %s1832 = scalar_lea.vmem [#allocation5], %s1831
        %s1833 = sand.u32 %s284, 1
        %s1834 = scalar_lea.sflag [#allocation8], %s1833
        %s1835 = sand.u32 %s284, 1
        %s1836 = smul.addr %s1835, 32
        %s1837 = scalar_lea.vmem [#allocation7], %s1836
        // Predicated region
        $region57: #{tpu_custom_call.1} parent=55 // pred_check
          %p1838 = pneg %p266
        $region58: #{tpu_custom_call.1} parent=55 // pred_check_branch
          %1840 = sbr.rel (%p1838) target = $region60
        $region59: #{tpu_custom_call.1} parent=55 // pred_region
          %s1842 = ssub.s32 128, 128
          %1843 = vsyncadd %s1829, %s1842
          %s1844 = sadd.s32 %s33, %s32
          %s1845 = smul.addr %s1844, 128
          %s1846 = scalar_lea.hbm %s9, %s1845
          %s1848 = sshll.u32 %s1832, 4
          %s1849 = int_to_ptr.vmem [resolvable:$true] %s1848
          %1851 = dma.vmem_to_hbm [thread:$0]  %s1849, 128, %s1846, %s1829
        $region60: #{tpu_custom_call.1} parent=55 // pred_fallthru
          _
        // Predicated region
        $region61: #{tpu_custom_call.1} parent=55 // pred_check
          %p1852 = pneg %p294
        $region62: #{tpu_custom_call.1} parent=55 // pred_check_branch
          %1854 = sbr.rel (%p1852) target = $region64
        $region63: #{tpu_custom_call.1} parent=55 // pred_region
          %s1856 = ssub.s32 512, 512
          %1857 = vsyncadd %s1834, %s1856
          %s1858 = smul.addr %s32, 4
          %s1859 = sadd.s32 %s33, %s1858
          %s1860 = smul.addr %s1859, 128
          %s1861 = scalar_lea.hbm %s10, %s1860
          %s1862 = sshll.u32 %s1837, 4
          %s1863 = int_to_ptr.vmem [resolvable:$true] %s1862
          %1868 = dma.vmem_to_hbm [thread:$0]  %s1863, 512, %s1861, %s1834, 128, 128, 8
        $region64: #{tpu_custom_call.1} parent=55 // pred_fallthru
          _
      $region56: #{tpu_custom_call.1} parent=5 // pred_fallthru
        _
      %p1869 = scmp.le.s32.totalorder 2, %s23
      // Predicated region
      $region65: #{tpu_custom_call.1} parent=5 // pred_check
        %p1870 = pneg %p1869
      $region66: #{tpu_custom_call.1} parent=5 // pred_check_branch
        %1872 = sbr.rel (%p1870) target = $region68
      $region67: #{tpu_custom_call.1} parent=5 // pred_region
        %s1873 = ssub.s32 %s23, 2
        // Predicated region
        $region69: #{tpu_custom_call.1} parent=67 // pred_check
          %p1874 = pneg %p272
        $region70: #{tpu_custom_call.1} parent=67 // pred_check_branch
          %1876 = sbr.rel (%p1874) target = $region72
        $region71: #{tpu_custom_call.1} parent=67 // pred_region
          %s1877 = sand.u32 %s257, 1
          %s1878 = scalar_lea.sflag [#allocation6], %s1877
          %s1879 = sand.u32 %s257, 1
          %s1880 = smul.addr %s1879, 8
          %s1881 = scalar_lea.vmem [#allocation5], %s1880
          %1882 = dma.done %s1878, 128
        $region72: #{tpu_custom_call.1} parent=67 // pred_fallthru
          _
        // Predicated region
        $region73: #{tpu_custom_call.1} parent=67 // pred_check
          %p1883 = pneg %p300
        $region74: #{tpu_custom_call.1} parent=67 // pred_check_branch
          %1885 = sbr.rel (%p1883) target = $region76
        $region75: #{tpu_custom_call.1} parent=67 // pred_region
          %s1886 = sand.u32 %s285, 1
          %s1887 = scalar_lea.sflag [#allocation8], %s1886
          %s1888 = sand.u32 %s285, 1
          %s1889 = smul.addr %s1888, 32
          %s1890 = scalar_lea.vmem [#allocation7], %s1889
          %1891 = dma.done %s1887, 512
        $region76: #{tpu_custom_call.1} parent=67 // pred_fallthru
          _
      $region68: #{tpu_custom_call.1} parent=5 // pred_fallthru
        _
    $region6: #{tpu_custom_call.1} parent=1 // loop_footer
      %s27 = sadd.s32 1, %s23
    $region7: #{tpu_custom_call.1} parent=1 // loop_footer_branch
      %22 = sbr.rel target = $region3
    $region8: #{tpu_custom_call.1} parent=1 // loop_exit
      _
    %1892 = vsyncpa [#allocation6], 1
    %s1893 = scalar_lea.sflag [#allocation6], 1
    %1894 = vsyncpa %s1893, 1
    %1895 = vsyncpa [#allocation8], 1
    %s1896 = scalar_lea.sflag [#allocation8], 1
    %1897 = vsyncpa %s1896, 1

</llo_original>
